<compile_context>
chip_gen: v6e
topology: v6e:2x2x1
jax: 0.10.0
libtpu: 0.0.40
codegen_flags: <defaults>
</compile_context>

<pallas_src>
import functools

import jax
import jax.numpy as jnp
from jax.experimental import pallas as pl
from jax.experimental.pallas import tpu as pltpu

HIDDEN = 512
LANE = 128


def _round_up(n, m):
    return ((n + m - 1) // m) * m


def fc_dropout_kernel(x_ref, w1_ref, b1_ref, w2_ref, b2_ref, w3_ref, b3_ref,
                      m1_ref, m2_ref, m3_ref, o_ref, *, apply_dropout):
    # Layer 1: (tm, Cp) @ (Cp, 512), bf16 operands, f32 accumulation on the MXU.
    h = jnp.dot(x_ref[...], w1_ref[...], preferred_element_type=jnp.float32)
    h = jnp.maximum(h + b1_ref[...], 0.0)
    if apply_dropout:
        h = h * m1_ref[...]          # mask values are {0, 1/(1-p)} (scale folded in)

    # Layer 2: (tm, 512) @ (512, 512)
    h = jnp.dot(h.astype(jnp.bfloat16), w2_ref[...],
                preferred_element_type=jnp.float32)
    h = jnp.maximum(h + b2_ref[...], 0.0)
    if apply_dropout:
        h = h * m2_ref[...]

    # Layer 3: (tm, 512) @ (512, Cp)
    h = jnp.dot(h.astype(jnp.bfloat16), w3_ref[...],
                preferred_element_type=jnp.float32)
    h = jnp.maximum(h + b3_ref[...], 0.0)
    if apply_dropout:
        h = h * m3_ref[...]

    o_ref[...] = h.astype(o_ref.dtype)


def fc_dropout_layers(x, params, *, p, key=None, tile_m=256):
    """x: (N, C) float32.  params: (w1,b1,w2,b2,w3,b3) with w_i stored (in, out).

    Dropout uses training-mode (MC-dropout) semantics: Bernoulli keep mask with
    prob (1-p), survivors scaled by 1/(1-p).  Masks come from `key` (jax.random).
    """
    N, C = x.shape
    w1, b1, w2, b2, w3, b3 = params
    assert w1.shape == (C, HIDDEN) and w2.shape == (HIDDEN, HIDDEN)
    assert w3.shape == (HIDDEN, C)

    Cp = _round_up(C, LANE)              # lane-dense input/output blocks
    tm = min(tile_m, _round_up(N, 8))    # big tiles for big N, no waste for tiny N
    Np = _round_up(N, tm)
    grid = (Np // tm,)

    # Pad + cast MXU operands to bf16 once, host-side.
    xp = jnp.pad(x, ((0, Np - N), (0, Cp - C))).astype(jnp.bfloat16)
    w1p = jnp.pad(w1, ((0, Cp - C), (0, 0))).astype(jnp.bfloat16)
    w2p = w2.astype(jnp.bfloat16)
    w3p = jnp.pad(w3, ((0, 0), (0, Cp - C))).astype(jnp.bfloat16)
    b3p = jnp.pad(b3, ((0, 0), (0, Cp - C)))

    apply_dropout = float(p) > 0.0
    if apply_dropout:
        if key is None:
            key = jax.random.PRNGKey(0)
        k1, k2, k3 = jax.random.split(key, 3)
        scale = jnp.float32(1.0 / (1.0 - p))
        m1 = jax.random.bernoulli(k1, 1.0 - p, (Np, HIDDEN)).astype(jnp.float32) * scale
        m2 = jax.random.bernoulli(k2, 1.0 - p, (Np, HIDDEN)).astype(jnp.float32) * scale
        m3 = jax.random.bernoulli(k3, 1.0 - p, (Np, Cp)).astype(jnp.float32) * scale
    else:
        m1 = jnp.ones((Np, HIDDEN), jnp.float32)
        m2 = jnp.ones((Np, HIDDEN), jnp.float32)
        m3 = jnp.ones((Np, Cp), jnp.float32)

    kernel = functools.partial(fc_dropout_kernel, apply_dropout=apply_dropout)

    out = pl.pallas_call(
        kernel,
        out_shape=jax.ShapeDtypeStruct((Np, Cp), jnp.float32),
        grid=grid,
        in_specs=[
            pl.BlockSpec((tm, Cp), lambda i: (i, 0)),           # x tile
            pl.BlockSpec((Cp, HIDDEN), lambda i: (0, 0)),       # W1 (resident)
            pl.BlockSpec((1, HIDDEN), lambda i: (0, 0)),        # b1
            pl.BlockSpec((HIDDEN, HIDDEN), lambda i: (0, 0)),   # W2
            pl.BlockSpec((1, HIDDEN), lambda i: (0, 0)),        # b2
            pl.BlockSpec((HIDDEN, Cp), lambda i: (0, 0)),       # W3
            pl.BlockSpec((1, Cp), lambda i: (0, 0)),            # b3
            pl.BlockSpec((tm, HIDDEN), lambda i: (i, 0)),       # dropout mask 1
            pl.BlockSpec((tm, HIDDEN), lambda i: (i, 0)),       # dropout mask 2
            pl.BlockSpec((tm, Cp), lambda i: (i, 0)),           # dropout mask 3
        ],
        out_specs=pl.BlockSpec((tm, Cp), lambda i: (i, 0)),
        compiler_params=pltpu.CompilerParams(
            dimension_semantics=("parallel",)),                 # independent row tiles
    )(xp, w1p, b1, w2p, b2, w3p, b3p, m1, m2, m3)

    return out[:N, :C]


def init_params(key, in_channels):
    """nn.Linear default init: U(-1/sqrt(fan_in), 1/sqrt(fan_in)), w stored (in, out)."""
    def linear(key, fan_in, fan_out):
        kw, kb = jax.random.split(key)
        bound = 1.0 / (fan_in ** 0.5)
        w = jax.random.uniform(kw, (fan_in, fan_out), jnp.float32, -bound, bound)
        b = jax.random.uniform(kb, (1, fan_out), jnp.float32, -bound, bound)
        return w, b

    k1, k2, k3 = jax.random.split(key, 3)
    w1, b1 = linear(k1, in_channels, HIDDEN)
    w2, b2 = linear(k2, HIDDEN, HIDDEN)
    w3, b3 = linear(k3, HIDDEN, in_channels)
    return (w1, b1, w2, b2, w3, b3)


def reference_no_dropout(x, params):
    """Reference mirroring the kernel's bf16-operand / f32-accumulate matmuls."""
    w1, b1, w2, b2, w3, b3 = params
    bf = jnp.bfloat16
    h = jnp.dot(x.astype(bf), w1.astype(bf), preferred_element_type=jnp.float32)
    h = jnp.maximum(h + b1, 0.0)
    h = jnp.dot(h.astype(bf), w2.astype(bf), preferred_element_type=jnp.float32)
    h = jnp.maximum(h + b2, 0.0)
    h = jnp.dot(h.astype(bf), w3.astype(bf), preferred_element_type=jnp.float32)
    h = jnp.maximum(h + b3, 0.0)
    return h


if __name__ == "__main__":
    in_channels = 32
    N = 16
    p = 0.25

    key = jax.random.PRNGKey(0)
    kx, kp, kd = jax.random.split(key, 3)
    x = jax.random.normal(kx, (N, in_channels), jnp.float32)
    params = init_params(kp, in_channels)

    # Deterministic path (dropout disabled) vs. reference.
    out_nodrop = fc_dropout_layers(x, params, p=0.0)
    ref = reference_no_dropout(x, params)
    assert out_nodrop.shape == (N, in_channels)
    assert jnp.allclose(out_nodrop, ref, atol=1e-2, rtol=1e-2), "mismatch vs reference"

    # MC-dropout forward (training-mode dropout semantics).
    out = fc_dropout_layers(x, params, p=p, key=kd)
    out = jax.block_until_ready(out)
    assert out.shape == (N, in_channels)
    assert bool(jnp.all(jnp.isfinite(out)))
    assert bool(jnp.all(out >= 0.0))  # ReLU then mask -> non-negative
    print("KERNEL_OK")
</pallas_src>

<mosaic_0001>
module attributes {stable_mosaic.version = 11 : i64} {
  func.func @fc_dropout_kernel(%arg0: i32, %arg1: memref<16x128xbf16, #tpu.memory_space<vmem>>, %arg2: memref<128x512xbf16, #tpu.memory_space<vmem>>, %arg3: memref<1x512xf32, #tpu.memory_space<vmem>>, %arg4: memref<512x512xbf16, #tpu.memory_space<vmem>>, %arg5: memref<1x512xf32, #tpu.memory_space<vmem>>, %arg6: memref<512x128xbf16, #tpu.memory_space<vmem>>, %arg7: memref<1x128xf32, #tpu.memory_space<vmem>>, %arg8: memref<16x512xf32, #tpu.memory_space<vmem>>, %arg9: memref<16x512xf32, #tpu.memory_space<vmem>>, %arg10: memref<16x128xf32, #tpu.memory_space<vmem>>, %arg11: memref<16x128xf32, #tpu.memory_space<vmem>>) attributes {dimension_semantics = [#tpu.dimension_semantics<parallel>], iteration_bounds = array<i64: 1>, scalar_prefetch = 0 : i64, scratch_operands = 0 : i64, tpu.core_type = #tpu.core_type<tc>, window_params = [{transform_indices = @transform_0, window_bounds = array<i64: 16, 128>}, {pipeline_mode = #tpu.pipeline_mode<synchronous>, transform_indices = @transform_1, window_bounds = array<i64: 128, 512>}, {pipeline_mode = #tpu.pipeline_mode<synchronous>, transform_indices = @transform_2, window_bounds = array<i64: 1, 512>}, {pipeline_mode = #tpu.pipeline_mode<synchronous>, transform_indices = @transform_3, window_bounds = array<i64: 512, 512>}, {pipeline_mode = #tpu.pipeline_mode<synchronous>, transform_indices = @transform_4, window_bounds = array<i64: 1, 512>}, {pipeline_mode = #tpu.pipeline_mode<synchronous>, transform_indices = @transform_5, window_bounds = array<i64: 512, 128>}, {pipeline_mode = #tpu.pipeline_mode<synchronous>, transform_indices = @transform_6, window_bounds = array<i64: 1, 128>}, {transform_indices = @transform_7, window_bounds = array<i64: 16, 512>}, {transform_indices = @transform_8, window_bounds = array<i64: 16, 512>}, {transform_indices = @transform_9, window_bounds = array<i64: 16, 128>}, {transform_indices = @transform_10, window_bounds = array<i64: 16, 128>}]} {
    %c0 = arith.constant 0 : index
    %c0_0 = arith.constant 0 : index
    %0 = vector.load %arg1[%c0, %c0_0] : memref<16x128xbf16, #tpu.memory_space<vmem>>, vector<16x128xbf16>
    %c0_1 = arith.constant 0 : index
    %c0_2 = arith.constant 0 : index
    %1 = vector.load %arg2[%c0_1, %c0_2] : memref<128x512xbf16, #tpu.memory_space<vmem>>, vector<128x512xbf16>
    %cst = arith.constant dense<0.000000e+00> : vector<16x512xf32>
    %2 = tpu.matmul %0, %1, %cst {dimension_numbers = #tpu.dot_dimension_numbers<[1], [0], [0], [1], [0, 0, 1, 1], [], []>} : vector<16x128xbf16>, vector<128x512xbf16>, vector<16x512xf32> -> vector<16x512xf32>
    %c0_3 = arith.constant 0 : index
    %c0_4 = arith.constant 0 : index
    %3 = vector.load %arg3[%c0_3, %c0_4] : memref<1x512xf32, #tpu.memory_space<vmem>>, vector<1x512xf32>
    %4 = vector.broadcast %3 : vector<1x512xf32> to vector<16x512xf32>
    %5 = arith.addf %2, %4 : vector<16x512xf32>
    %cst_5 = arith.constant 0.000000e+00 : f32
    %6 = vector.broadcast %cst_5 : f32 to vector<16x512xf32>
    %7 = arith.maximumf %5, %6 : vector<16x512xf32>
    %8 = arith.truncf %7 : vector<16x512xf32> to vector<16x512xbf16>
    %c0_6 = arith.constant 0 : index
    %c0_7 = arith.constant 0 : index
    %9 = vector.load %arg4[%c0_6, %c0_7] : memref<512x512xbf16, #tpu.memory_space<vmem>>, vector<512x512xbf16>
    %cst_8 = arith.constant dense<0.000000e+00> : vector<16x512xf32>
    %10 = tpu.matmul %8, %9, %cst_8 {dimension_numbers = #tpu.dot_dimension_numbers<[1], [0], [0], [1], [0, 0, 1, 1], [], []>} : vector<16x512xbf16>, vector<512x512xbf16>, vector<16x512xf32> -> vector<16x512xf32>
    %c0_9 = arith.constant 0 : index
    %c0_10 = arith.constant 0 : index
    %11 = vector.load %arg5[%c0_9, %c0_10] : memref<1x512xf32, #tpu.memory_space<vmem>>, vector<1x512xf32>
    %12 = vector.broadcast %11 : vector<1x512xf32> to vector<16x512xf32>
    %13 = arith.addf %10, %12 : vector<16x512xf32>
    %cst_11 = arith.constant 0.000000e+00 : f32
    %14 = vector.broadcast %cst_11 : f32 to vector<16x512xf32>
    %15 = arith.maximumf %13, %14 : vector<16x512xf32>
    %16 = arith.truncf %15 : vector<16x512xf32> to vector<16x512xbf16>
    %c0_12 = arith.constant 0 : index
    %c0_13 = arith.constant 0 : index
    %17 = vector.load %arg6[%c0_12, %c0_13] : memref<512x128xbf16, #tpu.memory_space<vmem>>, vector<512x128xbf16>
    %cst_14 = arith.constant dense<0.000000e+00> : vector<16x128xf32>
    %18 = tpu.matmul %16, %17, %cst_14 {dimension_numbers = #tpu.dot_dimension_numbers<[1], [0], [0], [1], [0, 0, 1, 1], [], []>} : vector<16x512xbf16>, vector<512x128xbf16>, vector<16x128xf32> -> vector<16x128xf32>
    %c0_15 = arith.constant 0 : index
    %c0_16 = arith.constant 0 : index
    %19 = vector.load %arg7[%c0_15, %c0_16] : memref<1x128xf32, #tpu.memory_space<vmem>>, vector<1x128xf32>
    %20 = vector.broadcast %19 : vector<1x128xf32> to vector<16x128xf32>
    %21 = arith.addf %18, %20 : vector<16x128xf32>
    %cst_17 = arith.constant 0.000000e+00 : f32
    %22 = vector.broadcast %cst_17 : f32 to vector<16x128xf32>
    %23 = arith.maximumf %21, %22 : vector<16x128xf32>
    %c0_18 = arith.constant 0 : index
    %c0_19 = arith.constant 0 : index
    %24 = vector.load %arg11[%c0_18, %c0_19] : memref<16x128xf32, #tpu.memory_space<vmem>>, vector<16x128xf32>
    tpu.vector_store %arg11[%c0_18, %c0_19], %23 {strides = array<i32>} : memref<16x128xf32, #tpu.memory_space<vmem>>, vector<16x128xf32>,
    return
  }
  func.func @transform_0(%arg0: i32) -> (i32, i32) {
    %c0_i32 = arith.constant 0 : i32
    %c0_i32_0 = arith.constant 0 : i32
    return %arg0, %c0_i32 : i32, i32
  }
  func.func @transform_1(%arg0: i32) -> (i32, i32) {
    %c0_i32 = arith.constant 0 : i32
    %c0_i32_0 = arith.constant 0 : i32
    %c0_i32_1 = arith.constant 0 : i32
    return %c0_i32, %c0_i32_0 : i32, i32
  }
  func.func @transform_2(%arg0: i32) -> (i32, i32) {
    %c0_i32 = arith.constant 0 : i32
    %c0_i32_0 = arith.constant 0 : i32
    %c0_i32_1 = arith.constant 0 : i32
    return %c0_i32, %c0_i32_0 : i32, i32
  }
  func.func @transform_3(%arg0: i32) -> (i32, i32) {
    %c0_i32 = arith.constant 0 : i32
    %c0_i32_0 = arith.constant 0 : i32
    %c0_i32_1 = arith.constant 0 : i32
    return %c0_i32, %c0_i32_0 : i32, i32
  }
  func.func @transform_4(%arg0: i32) -> (i32, i32) {
    %c0_i32 = arith.constant 0 : i32
    %c0_i32_0 = arith.constant 0 : i32
    %c0_i32_1 = arith.constant 0 : i32
    return %c0_i32, %c0_i32_0 : i32, i32
  }
  func.func @transform_5(%arg0: i32) -> (i32, i32) {
    %c0_i32 = arith.constant 0 : i32
    %c0_i32_0 = arith.constant 0 : i32
    %c0_i32_1 = arith.constant 0 : i32
    return %c0_i32, %c0_i32_0 : i32, i32
  }
  func.func @transform_6(%arg0: i32) -> (i32, i32) {
    %c0_i32 = arith.constant 0 : i32
    %c0_i32_0 = arith.constant 0 : i32
    %c0_i32_1 = arith.constant 0 : i32
    return %c0_i32, %c0_i32_0 : i32, i32
  }
  func.func @transform_7(%arg0: i32) -> (i32, i32) {
    %c0_i32 = arith.constant 0 : i32
    %c0_i32_0 = arith.constant 0 : i32
    return %arg0, %c0_i32 : i32, i32
  }
  func.func @transform_8(%arg0: i32) -> (i32, i32) {
    %c0_i32 = arith.constant 0 : i32
    %c0_i32_0 = arith.constant 0 : i32
    return %arg0, %c0_i32 : i32, i32
  }
  func.func @transform_9(%arg0: i32) -> (i32, i32) {
    %c0_i32 = arith.constant 0 : i32
    %c0_i32_0 = arith.constant 0 : i32
    return %arg0, %c0_i32 : i32, i32
  }
  func.func @transform_10(%arg0: i32) -> (i32, i32) {
    %c0_i32 = arith.constant 0 : i32
    %c0_i32_0 = arith.constant 0 : i32
    return %arg0, %c0_i32 : i32, i32
  }
}

</mosaic_0001>

<llo_original>
// kernel: tpu_custom_call.1
$region0: #{tpu_custom_call.1}
  #allocation0 [shape = 'u32[]', space=smem, size = 0x4, offset = 0x4, fixed_abs, tag = 'smem constant byte address 0x4 - core index']
  #allocation1 [shape = 'u32[144,128]{1,0:T(1,128)}', space=vmem, size = 0x12000, scoped, tag = 'internal scratch']
  %s0 = inlined_call_operand.hbm [shape: bf16[16,128], index: 0, kind: input, shape index: {}]
  %s1 = inlined_call_operand.hbm [shape: bf16[128,512], index: 1, kind: input, shape index: {}]
  %s2 = inlined_call_operand.hbm [shape: f32[1,512], index: 2, kind: input, shape index: {}]
  %s3 = inlined_call_operand.hbm [shape: bf16[512,512], index: 3, kind: input, shape index: {}]
  %s4 = inlined_call_operand.hbm [shape: f32[1,512], index: 4, kind: input, shape index: {}]
  %s5 = inlined_call_operand.hbm [shape: bf16[512,128], index: 5, kind: input, shape index: {}]
  %s6 = inlined_call_operand.hbm [shape: f32[1,128], index: 6, kind: input, shape index: {}]
  %s7 = inlined_call_operand.hbm [shape: f32[16,512], index: 7, kind: input, shape index: {}]
  %s8 = inlined_call_operand.hbm [shape: f32[16,512], index: 8, kind: input, shape index: {}]
  %s9 = inlined_call_operand.vmem [shape: f32[16,128], index: 9, kind: input, shape index: {}]
  %s10 = inlined_call_operand.hbm [shape: f32[16,128], index: 10, kind: output, shape index: {}]
  %s11 = sld [smem:[#allocation0]]
  $region86: #{tpu_custom_call.1} parent=0
    _
  %s13 = ssub.s32 1, %s11
  %s14 = scalar_select 0, %s13, %s11
  $region1: #{tpu_custom_call.1} parent=0
    #allocation2 [shape = 'u8[4096]{0}', space=vmem, size = 0x1000, scoped, tag = 'input window, operand 0, single buffered']
    #allocation3 [shape = 's32[1]{0}', space=sflag, size = 0x4, scoped, tag = 'scoped memory for tpu_custom_call.1']
    #allocation4 [shape = 's32[1]{0}', space=sflag, size = 0x4, scoped, tag = 'scoped memory for tpu_custom_call.1']
    #allocation5 [shape = 'u8[131072]{0}', space=vmem, size = 0x20000, scoped, tag = 'input window, operand 1, single buffered']
    #allocation6 [shape = 's32[1]{0}', space=sflag, size = 0x4, scoped, tag = 'scoped memory for tpu_custom_call.1']
    #allocation7 [shape = 'u8[2048]{0}', space=vmem, size = 0x800, scoped, tag = 'input window, operand 2, single buffered']
    #allocation8 [shape = 'u8[524288]{0}', space=vmem, size = 0x80000, scoped, tag = 'input window, operand 3, single buffered']
    #allocation9 [shape = 's32[1]{0}', space=sflag, size = 0x4, scoped, tag = 'scoped memory for tpu_custom_call.1']
    #allocation10 [shape = 'u8[2048]{0}', space=vmem, size = 0x800, scoped, tag = 'input window, operand 4, single buffered']
    #allocation11 [shape = 'u8[131072]{0}', space=vmem, size = 0x20000, scoped, tag = 'input window, operand 5, single buffered']
    #allocation12 [shape = 's32[1]{0}', space=sflag, size = 0x4, scoped, tag = 'scoped memory for tpu_custom_call.1']
    #allocation13 [shape = 'u8[512]{0}', space=vmem, size = 0x400, scoped, tag = 'input window, operand 6, single buffered']
    #allocation14 [shape = 'u8[32768]{0}', space=vmem, size = 0x8000, scoped, tag = 'input window, operand 7, single buffered']
    #allocation15 [shape = 's32[1]{0}', space=sflag, size = 0x4, scoped, tag = 'scoped memory for tpu_custom_call.1']
    #allocation16 [shape = 'u8[32768]{0}', space=vmem, size = 0x8000, scoped, tag = 'input window, operand 8, single buffered']
    #allocation17 [shape = 'u8[8192]{0}', space=vmem, size = 0x2000, scoped, tag = 'output window, operand 0, single buffered']
    %15 = vsyncpa [#allocation3], 0
    %16 = vsyncpa [#allocation6], 0
    %17 = vsyncpa [#allocation9], 0
    %18 = vsyncpa [#allocation12], 0
    %19 = vsyncpa [#allocation15], 0
    %20 = vsyncpa [#allocation4], 0
    // Predicated region
    $region2: #{tpu_custom_call.1} parent=1 // pred_check
      _
    $region3: #{tpu_custom_call.1} parent=1 // pred_check_branch
      %22 = sbr.rel (0) target = $region5
    $region4: #{tpu_custom_call.1} parent=1 // pred_region
      %s24 = ssub.s32 128, 128
      %25 = vsyncadd [#allocation3], %s24
      %s26 = sshll.u32 [#allocation2], 4
      %s27 = int_to_ptr.vmem [resolvable:$true] %s26
      %32 = dma.hbm_to_vmem [thread:$0]  %s0, 128, %s27, [#allocation3], 64, 64, 4
    $region5: #{tpu_custom_call.1} parent=1 // pred_fallthru
      _
    // Predicated region
    $region6: #{tpu_custom_call.1} parent=1 // pred_check
      _
    $region7: #{tpu_custom_call.1} parent=1 // pred_check_branch
      %34 = sbr.rel (0) target = $region9
    $region8: #{tpu_custom_call.1} parent=1 // pred_region
      %s36 = ssub.s32 4096, 4096
      %37 = vsyncadd [#allocation6], %s36
      %s38 = sshll.u32 [#allocation5], 4
      %s39 = int_to_ptr.vmem [resolvable:$true] %s38
      %44 = dma.hbm_to_vmem [thread:$0]  %s1, 4096, %s39, [#allocation6], 256, 256, 16
    $region9: #{tpu_custom_call.1} parent=1 // pred_fallthru
      _
    // Predicated region
    $region10: #{tpu_custom_call.1} parent=1 // pred_check
      _
    $region11: #{tpu_custom_call.1} parent=1 // pred_check_branch
      %46 = sbr.rel (0) target = $region13
    $region12: #{tpu_custom_call.1} parent=1 // pred_region
      %s48 = ssub.s32 64, 64
      %49 = vsyncadd [#allocation6], %s48
      %s51 = sshll.u32 [#allocation7], 4
      %s52 = int_to_ptr.vmem [resolvable:$true] %s51
      %54 = dma.hbm_to_vmem [thread:$0]  %s2, 64, %s52, [#allocation6]
    $region13: #{tpu_custom_call.1} parent=1 // pred_fallthru
      _
    // Predicated region
    $region14: #{tpu_custom_call.1} parent=1 // pred_check
      _
    $region15: #{tpu_custom_call.1} parent=1 // pred_check_branch
      %56 = sbr.rel (0) target = $region17
    $region16: #{tpu_custom_call.1} parent=1 // pred_region
      %s58 = ssub.s32 16384, 16384
      %59 = vsyncadd [#allocation9], %s58
      %s60 = sshll.u32 [#allocation8], 4
      %s61 = int_to_ptr.vmem [resolvable:$true] %s60
      %66 = dma.hbm_to_vmem [thread:$0]  %s3, 16384, %s61, [#allocation9], 256, 256, 16
    $region17: #{tpu_custom_call.1} parent=1 // pred_fallthru
      _
    // Predicated region
    $region18: #{tpu_custom_call.1} parent=1 // pred_check
      _
    $region19: #{tpu_custom_call.1} parent=1 // pred_check_branch
      %68 = sbr.rel (0) target = $region21
    $region20: #{tpu_custom_call.1} parent=1 // pred_region
      %s70 = ssub.s32 64, 64
      %71 = vsyncadd [#allocation9], %s70
      %s73 = sshll.u32 [#allocation10], 4
      %s74 = int_to_ptr.vmem [resolvable:$true] %s73
      %76 = dma.hbm_to_vmem [thread:$0]  %s4, 64, %s74, [#allocation9]
    $region21: #{tpu_custom_call.1} parent=1 // pred_fallthru
      _
    // Predicated region
    $region22: #{tpu_custom_call.1} parent=1 // pred_check
      _
    $region23: #{tpu_custom_call.1} parent=1 // pred_check_branch
      %78 = sbr.rel (0) target = $region25
    $region24: #{tpu_custom_call.1} parent=1 // pred_region
      %s80 = ssub.s32 4096, 4096
      %81 = vsyncadd [#allocation12], %s80
      %s82 = sshll.u32 [#allocation11], 4
      %s83 = int_to_ptr.vmem [resolvable:$true] %s82
      %88 = dma.hbm_to_vmem [thread:$0]  %s5, 4096, %s83, [#allocation12], 64, 64, 4
    $region25: #{tpu_custom_call.1} parent=1 // pred_fallthru
      _
    // Predicated region
    $region26: #{tpu_custom_call.1} parent=1 // pred_check
      _
    $region27: #{tpu_custom_call.1} parent=1 // pred_check_branch
      %90 = sbr.rel (0) target = $region29
    $region28: #{tpu_custom_call.1} parent=1 // pred_region
      %s92 = ssub.s32 16, 16
      %93 = vsyncadd [#allocation12], %s92
      %s95 = sshll.u32 [#allocation13], 4
      %s96 = int_to_ptr.vmem [resolvable:$true] %s95
      %98 = dma.hbm_to_vmem [thread:$0]  %s6, 16, %s96, [#allocation12]
    $region29: #{tpu_custom_call.1} parent=1 // pred_fallthru
      _
    // Predicated region
    $region30: #{tpu_custom_call.1} parent=1 // pred_check
      _
    $region31: #{tpu_custom_call.1} parent=1 // pred_check_branch
      %100 = sbr.rel (0) target = $region33
    $region32: #{tpu_custom_call.1} parent=1 // pred_region
      %s102 = ssub.s32 1024, 1024
      %103 = vsyncadd [#allocation15], %s102
      %s104 = sshll.u32 [#allocation14], 4
      %s105 = int_to_ptr.vmem [resolvable:$true] %s104
      %110 = dma.hbm_to_vmem [thread:$0]  %s7, 1024, %s105, [#allocation15], 512, 512, 32
    $region33: #{tpu_custom_call.1} parent=1 // pred_fallthru
      _
    // Predicated region
    $region34: #{tpu_custom_call.1} parent=1 // pred_check
      _
    $region35: #{tpu_custom_call.1} parent=1 // pred_check_branch
      %112 = sbr.rel (0) target = $region37
    $region36: #{tpu_custom_call.1} parent=1 // pred_region
      %s114 = ssub.s32 1024, 1024
      %115 = vsyncadd [#allocation15], %s114
      %s116 = sshll.u32 [#allocation16], 4
      %s117 = int_to_ptr.vmem [resolvable:$true] %s116
      %122 = dma.hbm_to_vmem [thread:$0]  %s8, 1024, %s117, [#allocation15], 512, 512, 32
    $region37: #{tpu_custom_call.1} parent=1 // pred_fallthru
      _
    // Predicated region
    $region38: #{tpu_custom_call.1} parent=1 // pred_check
      _
    $region39: #{tpu_custom_call.1} parent=1 // pred_check_branch
      %124 = sbr.rel (0) target = $region41
    $region40: #{tpu_custom_call.1} parent=1 // pred_region
      _
    $region41: #{tpu_custom_call.1} parent=1 // pred_fallthru
      _
    // Predicated region
    $region42: #{tpu_custom_call.1} parent=1 // pred_check
      _
    $region43: #{tpu_custom_call.1} parent=1 // pred_check_branch
      %126 = sbr.rel (0) target = $region45
    $region44: #{tpu_custom_call.1} parent=1 // pred_region
      %127 = dma.done [#allocation3], 128
    $region45: #{tpu_custom_call.1} parent=1 // pred_fallthru
      _
    // Predicated region
    $region46: #{tpu_custom_call.1} parent=1 // pred_check
      _
    $region47: #{tpu_custom_call.1} parent=1 // pred_check_branch
      %129 = sbr.rel (0) target = $region49
    $region48: #{tpu_custom_call.1} parent=1 // pred_region
      %130 = dma.done [#allocation6], 4096
    $region49: #{tpu_custom_call.1} parent=1 // pred_fallthru
      _
    // Predicated region
    $region50: #{tpu_custom_call.1} parent=1 // pred_check
      _
    $region51: #{tpu_custom_call.1} parent=1 // pred_check_branch
      %132 = sbr.rel (0) target = $region53
    $region52: #{tpu_custom_call.1} parent=1 // pred_region
      %133 = dma.done [#allocation6], 64
    $region53: #{tpu_custom_call.1} parent=1 // pred_fallthru
      _
    // Predicated region
    $region54: #{tpu_custom_call.1} parent=1 // pred_check
      _
    $region55: #{tpu_custom_call.1} parent=1 // pred_check_branch
      %135 = sbr.rel (0) target = $region57
    $region56: #{tpu_custom_call.1} parent=1 // pred_region
      %136 = dma.done [#allocation9], 16384
    $region57: #{tpu_custom_call.1} parent=1 // pred_fallthru
      _
    // Predicated region
    $region58: #{tpu_custom_call.1} parent=1 // pred_check
      _
    $region59: #{tpu_custom_call.1} parent=1 // pred_check_branch
      %138 = sbr.rel (0) target = $region61
    $region60: #{tpu_custom_call.1} parent=1 // pred_region
      %139 = dma.done [#allocation9], 64
    $region61: #{tpu_custom_call.1} parent=1 // pred_fallthru
      _
    // Predicated region
    $region62: #{tpu_custom_call.1} parent=1 // pred_check
      _
    $region63: #{tpu_custom_call.1} parent=1 // pred_check_branch
      %141 = sbr.rel (0) target = $region65
    $region64: #{tpu_custom_call.1} parent=1 // pred_region
      %142 = dma.done [#allocation12], 4096
    $region65: #{tpu_custom_call.1} parent=1 // pred_fallthru
      _
    // Predicated region
    $region66: #{tpu_custom_call.1} parent=1 // pred_check
      _
    $region67: #{tpu_custom_call.1} parent=1 // pred_check_branch
      %144 = sbr.rel (0) target = $region69
    $region68: #{tpu_custom_call.1} parent=1 // pred_region
      %145 = dma.done [#allocation12], 16
    $region69: #{tpu_custom_call.1} parent=1 // pred_fallthru
      _
    // Predicated region
    $region70: #{tpu_custom_call.1} parent=1 // pred_check
      _
    $region71: #{tpu_custom_call.1} parent=1 // pred_check_branch
      %147 = sbr.rel (0) target = $region73
    $region72: #{tpu_custom_call.1} parent=1 // pred_region
      %148 = dma.done [#allocation15], 1024
    $region73: #{tpu_custom_call.1} parent=1 // pred_fallthru
      _
    // Predicated region
    $region74: #{tpu_custom_call.1} parent=1 // pred_check
      _
    $region75: #{tpu_custom_call.1} parent=1 // pred_check_branch
      %150 = sbr.rel (0) target = $region77
    $region76: #{tpu_custom_call.1} parent=1 // pred_region
      %151 = dma.done [#allocation15], 1024
    $region77: #{tpu_custom_call.1} parent=1 // pred_fallthru
      _
    %v153 = vld [vmem:[#allocation2] sm:$0xf]
    %v154 = vld [vmem:[#allocation2 + $0x4] sm:$0xf]
    %v155 = vld [vmem:[#allocation5] sm:$0xff]
    %v156 = vld [vmem:[#allocation5 + $0x8] sm:$0xff]
    %v157 = vld [vmem:[#allocation5 + $0x10] sm:$0xff]
    %v158 = vld [vmem:[#allocation5 + $0x18] sm:$0xff]
    %v159 = vld [vmem:[#allocation5 + $0x20] sm:$0xff]
    %v160 = vld [vmem:[#allocation5 + $0x28] sm:$0xff]
    %v161 = vld [vmem:[#allocation5 + $0x30] sm:$0xff]
    %v162 = vld [vmem:[#allocation5 + $0x38] sm:$0xff]
    %v163 = vld [vmem:[#allocation5 + $0x40] sm:$0xff]
    %v164 = vld [vmem:[#allocation5 + $0x48] sm:$0xff]
    %v165 = vld [vmem:[#allocation5 + $0x50] sm:$0xff]
    %v166 = vld [vmem:[#allocation5 + $0x58] sm:$0xff]
    %v167 = vld [vmem:[#allocation5 + $0x60] sm:$0xff]
    %v168 = vld [vmem:[#allocation5 + $0x68] sm:$0xff]
    %v169 = vld [vmem:[#allocation5 + $0x70] sm:$0xff]
    %v170 = vld [vmem:[#allocation5 + $0x78] sm:$0xff]
    %v171 = vld [vmem:[#allocation5 + $0x80] sm:$0xff]
    %v172 = vld [vmem:[#allocation5 + $0x88] sm:$0xff]
    %v173 = vld [vmem:[#allocation5 + $0x90] sm:$0xff]
    %v174 = vld [vmem:[#allocation5 + $0x98] sm:$0xff]
    %v175 = vld [vmem:[#allocation5 + $0xa0] sm:$0xff]
    %v176 = vld [vmem:[#allocation5 + $0xa8] sm:$0xff]
    %v177 = vld [vmem:[#allocation5 + $0xb0] sm:$0xff]
    %v178 = vld [vmem:[#allocation5 + $0xb8] sm:$0xff]
    %v179 = vld [vmem:[#allocation5 + $0xc0] sm:$0xff]
    %v180 = vld [vmem:[#allocation5 + $0xc8] sm:$0xff]
    %v181 = vld [vmem:[#allocation5 + $0xd0] sm:$0xff]
    %v182 = vld [vmem:[#allocation5 + $0xd8] sm:$0xff]
    %v183 = vld [vmem:[#allocation5 + $0xe0] sm:$0xff]
    %v184 = vld [vmem:[#allocation5 + $0xe8] sm:$0xff]
    %v185 = vld [vmem:[#allocation5 + $0xf0] sm:$0xff]
    %v186 = vld [vmem:[#allocation5 + $0xf8] sm:$0xff]
    %v187 = vld [vmem:[#allocation7] sm:$0xf]
    %v189 = vlaneseq
    %v190 = vshrl.u32 %v189, 7
    %v191 = vsub.s32 0, %v190
    %v192 = vrot.slane %v187, %v191
    %v193 = vlaneseq
    %v194 = vshrl.u32 %v193, 7
    %v195 = vsub.s32 1, %v194
    %v196 = vrot.slane %v187, %v195
    %v197 = vlaneseq
    %v198 = vshrl.u32 %v197, 7
    %v199 = vsub.s32 2, %v198
    %v200 = vrot.slane %v187, %v199
    %v201 = vlaneseq
    %v202 = vshrl.u32 %v201, 7
    %v203 = vsub.s32 3, %v202
    %v204 = vrot.slane %v187, %v203
    %v211 = vunpack.c.l.b16 %v153
    %v212 = vunpack.c.l.b16 %v154
    %v213 = vpack.c.b16 %v212, %v211
    %v247 = vunpack.c.l.b16 %v155
    %v248 = vunpack.c.h.b16 %v155
    %v249 = vunpack.c.l.b16 %v156
    %v250 = vunpack.c.h.b16 %v156
    %v251 = vunpack.c.l.b16 %v157
    %v252 = vunpack.c.h.b16 %v157
    %v253 = vunpack.c.l.b16 %v158
    %v254 = vunpack.c.h.b16 %v158
    %v255 = vunpack.c.l.b16 %v159
    %v256 = vunpack.c.h.b16 %v159
    %v257 = vunpack.c.l.b16 %v160
    %v258 = vunpack.c.h.b16 %v160
    %v259 = vunpack.c.l.b16 %v161
    %v260 = vunpack.c.h.b16 %v161
    %v261 = vunpack.c.l.b16 %v162
    %v262 = vunpack.c.h.b16 %v162
    %v263 = vunpack.c.l.b16 %v163
    %v264 = vunpack.c.h.b16 %v163
    %v265 = vunpack.c.l.b16 %v164
    %v266 = vunpack.c.h.b16 %v164
    %v267 = vunpack.c.l.b16 %v165
    %v268 = vunpack.c.h.b16 %v165
    %v269 = vunpack.c.l.b16 %v166
    %v270 = vunpack.c.h.b16 %v166
    %v271 = vunpack.c.l.b16 %v167
    %v272 = vunpack.c.h.b16 %v167
    %v273 = vunpack.c.l.b16 %v168
    %v274 = vunpack.c.h.b16 %v168
    %v275 = vunpack.c.l.b16 %v169
    %v276 = vunpack.c.h.b16 %v169
    %v277 = vunpack.c.l.b16 %v170
    %v278 = vunpack.c.h.b16 %v170
    %v279 = vunpack.c.l.b16 %v171
    %v280 = vunpack.c.h.b16 %v171
    %v281 = vunpack.c.l.b16 %v172
    %v282 = vunpack.c.h.b16 %v172
    %v283 = vunpack.c.l.b16 %v173
    %v284 = vunpack.c.h.b16 %v173
    %v285 = vunpack.c.l.b16 %v174
    %v286 = vunpack.c.h.b16 %v174
    %v287 = vunpack.c.l.b16 %v175
    %v288 = vunpack.c.h.b16 %v175
    %v289 = vunpack.c.l.b16 %v176
    %v290 = vunpack.c.h.b16 %v176
    %v291 = vunpack.c.l.b16 %v177
    %v292 = vunpack.c.h.b16 %v177
    %v293 = vunpack.c.l.b16 %v178
    %v294 = vunpack.c.h.b16 %v178
    %v295 = vunpack.c.l.b16 %v179
    %v296 = vunpack.c.h.b16 %v179
    %v297 = vunpack.c.l.b16 %v180
    %v298 = vunpack.c.h.b16 %v180
    %v299 = vunpack.c.l.b16 %v181
    %v300 = vunpack.c.h.b16 %v181
    %v301 = vunpack.c.l.b16 %v182
    %v302 = vunpack.c.h.b16 %v182
    %v303 = vunpack.c.l.b16 %v183
    %v304 = vunpack.c.h.b16 %v183
    %v305 = vunpack.c.l.b16 %v184
    %v306 = vunpack.c.h.b16 %v184
    %v307 = vunpack.c.l.b16 %v185
    %v308 = vunpack.c.h.b16 %v185
    %v309 = vunpack.c.l.b16 %v186
    %v310 = vunpack.c.h.b16 %v186
    %v311 = vpack.c.b16 %v251, %v247
    %v312 = vpack.c.b16 %v252, %v248
    %v313 = vpack.c.b16 %v253, %v249
    %v314 = vpack.c.b16 %v254, %v250
    %v315 = vpack.c.b16 %v259, %v255
    %v316 = vpack.c.b16 %v260, %v256
    %v317 = vpack.c.b16 %v261, %v257
    %v318 = vpack.c.b16 %v262, %v258
    %v319 = vpack.c.b16 %v267, %v263
    %v320 = vpack.c.b16 %v268, %v264
    %v321 = vpack.c.b16 %v269, %v265
    %v322 = vpack.c.b16 %v270, %v266
    %v323 = vpack.c.b16 %v275, %v271
    %v324 = vpack.c.b16 %v276, %v272
    %v325 = vpack.c.b16 %v277, %v273
    %v326 = vpack.c.b16 %v278, %v274
    %v327 = vpack.c.b16 %v283, %v279
    %v328 = vpack.c.b16 %v284, %v280
    %v329 = vpack.c.b16 %v285, %v281
    %v330 = vpack.c.b16 %v286, %v282
    %v331 = vpack.c.b16 %v291, %v287
    %v332 = vpack.c.b16 %v292, %v288
    %v333 = vpack.c.b16 %v293, %v289
    %v334 = vpack.c.b16 %v294, %v290
    %v335 = vpack.c.b16 %v299, %v295
    %v336 = vpack.c.b16 %v300, %v296
    %v337 = vpack.c.b16 %v301, %v297
    %v338 = vpack.c.b16 %v302, %v298
    %v339 = vpack.c.b16 %v307, %v303
    %v340 = vpack.c.b16 %v308, %v304
    %v341 = vpack.c.b16 %v309, %v305
    %v342 = vpack.c.b16 %v310, %v306
    %375 = vmatprep.subr.bf16.mxu0 %v340
    %376 = vmatpush1.bf16.msra.mxu0 %v339
    %377 = vmatprep.subr.bf16.mxu0 %v336
    %378 = vmatpush1.bf16.msra.mxu0 %v335
    %379 = vmatprep.subr.bf16.mxu0 %v332
    %380 = vmatpush1.bf16.msra.mxu0 %v331
    %381 = vmatprep.subr.bf16.mxu0 %v328
    %382 = vmatpush1.bf16.msra.mxu0 %v327
    %383 = vmatprep.subr.bf16.mxu0 %v324
    %384 = vmatpush1.bf16.msra.mxu0 %v323
    %385 = vmatprep.subr.bf16.mxu0 %v320
    %386 = vmatpush1.bf16.msra.mxu0 %v319
    %387 = vmatprep.subr.bf16.mxu0 %v316
    %388 = vmatpush1.bf16.msra.mxu0 %v315
    %389 = vmatprep.subr.bf16.mxu0 %v312
    %390 = vmatpush1.bf16.msra.mxu0 %v311
    %391 = vmatprep.subr.bf16.mxu0 0
    %392 = vmatpush2.bf16.msra.mxu0 0
    %393 = vmatprep.subr.bf16.mxu0 0
    %394 = vmatpush2.bf16.msra.mxu0 0
    %395 = vmatprep.subr.bf16.mxu0 0
    %396 = vmatpush2.bf16.msra.mxu0 0
    %397 = vmatprep.subr.bf16.mxu0 0
    %398 = vmatpush2.bf16.msra.mxu0 0
    %399 = vmatprep.subr.bf16.mxu0 0
    %400 = vmatpush2.bf16.msra.mxu0 0
    %401 = vmatprep.subr.bf16.mxu0 0
    %402 = vmatpush2.bf16.msra.mxu0 0
    %403 = vmatprep.subr.bf16.mxu0 0
    %404 = vmatpush2.bf16.msra.mxu0 0
    %405 = vmatprep.subr.bf16.mxu0 0
    %406 = vmatpush2.bf16.msra.mxu0 0
    %407 = vmatprep.mubr.bf16.mxu0 0
    %408 = vmatmul.mubr.bf16.gmra.mxu0 %v213
    %v409 = vpop.f32.mrf.mxu0
    %v410 = vadd.f32 %v192, %v409
    %v411 = vpop.f32.mrf.mxu0
    %v412 = vadd.f32 %v196, %v411
    %v413 = vpop.f32.mrf.mxu0
    %v414 = vadd.f32 %v192, %v413
    %v415 = vpop.f32.mrf.mxu0
    %v416 = vadd.f32 %v196, %v415
    %417 = vdwg.mxu0
    %418 = vmatprep.subr.bf16.mxu0 %v342
    %419 = vmatpush1.bf16.msra.mxu0 %v341
    %420 = vmatprep.subr.bf16.mxu0 %v338
    %421 = vmatpush1.bf16.msra.mxu0 %v337
    %422 = vmatprep.subr.bf16.mxu0 %v334
    %423 = vmatpush1.bf16.msra.mxu0 %v333
    %424 = vmatprep.subr.bf16.mxu0 %v330
    %425 = vmatpush1.bf16.msra.mxu0 %v329
    %426 = vmatprep.subr.bf16.mxu0 %v326
    %427 = vmatpush1.bf16.msra.mxu0 %v325
    %428 = vmatprep.subr.bf16.mxu0 %v322
    %429 = vmatpush1.bf16.msra.mxu0 %v321
    %430 = vmatprep.subr.bf16.mxu0 %v318
    %431 = vmatpush1.bf16.msra.mxu0 %v317
    %432 = vmatprep.subr.bf16.mxu0 %v314
    %433 = vmatpush1.bf16.msra.mxu0 %v313
    %434 = vmatprep.subr.bf16.mxu0 0
    %435 = vmatpush2.bf16.msra.mxu0 0
    %436 = vmatprep.subr.bf16.mxu0 0
    %437 = vmatpush2.bf16.msra.mxu0 0
    %438 = vmatprep.subr.bf16.mxu0 0
    %439 = vmatpush2.bf16.msra.mxu0 0
    %440 = vmatprep.subr.bf16.mxu0 0
    %441 = vmatpush2.bf16.msra.mxu0 0
    %442 = vmatprep.subr.bf16.mxu0 0
    %443 = vmatpush2.bf16.msra.mxu0 0
    %444 = vmatprep.subr.bf16.mxu0 0
    %445 = vmatpush2.bf16.msra.mxu0 0
    %446 = vmatprep.subr.bf16.mxu0 0
    %447 = vmatpush2.bf16.msra.mxu0 0
    %448 = vmatprep.subr.bf16.mxu0 0
    %449 = vmatpush2.bf16.msra.mxu0 0
    %450 = vmatprep.mubr.bf16.mxu0 0
    %451 = vmatmul.mubr.bf16.gmra.mxu0 %v213
    %v452 = vpop.f32.mrf.mxu0
    %v453 = vadd.f32 %v200, %v452
    %v454 = vpop.f32.mrf.mxu0
    %v455 = vadd.f32 %v204, %v454
    %v456 = vpop.f32.mrf.mxu0
    %v457 = vadd.f32 %v200, %v456
    %v458 = vpop.f32.mrf.mxu0
    %v459 = vadd.f32 %v204, %v458
    %460 = vdwg.mxu0
    %v461 = vmax.f32 %v410, 0.0
    %v462 = vmax.f32 %v412, 0.0
    %v463 = vmax.f32 %v453, 0.0
    %v464 = vmax.f32 %v455, 0.0
    %v465 = vmax.f32 %v414, 0.0
    %v466 = vmax.f32 %v416, 0.0
    %v467 = vmax.f32 %v457, 0.0
    %v468 = vmax.f32 %v459, 0.0
    %v469 = vpack.c.bf16 %v465, %v461
    %v470 = vpack.c.bf16 %v466, %v462
    %v471 = vpack.c.bf16 %v467, %v463
    %v472 = vpack.c.bf16 %v468, %v464
    %v473 = vld [vmem:[#allocation8] sm:$0xff]
    %v474 = vld [vmem:[#allocation8 + $0x8] sm:$0xff]
    %v475 = vld [vmem:[#allocation8 + $0x10] sm:$0xff]
    %v476 = vld [vmem:[#allocation8 + $0x18] sm:$0xff]
    %v477 = vld [vmem:[#allocation8 + $0x20] sm:$0xff]
    %v478 = vld [vmem:[#allocation8 + $0x28] sm:$0xff]
    %v479 = vld [vmem:[#allocation8 + $0x30] sm:$0xff]
    %v480 = vld [vmem:[#allocation8 + $0x38] sm:$0xff]
    %v481 = vld [vmem:[#allocation8 + $0x40] sm:$0xff]
    %v482 = vld [vmem:[#allocation8 + $0x48] sm:$0xff]
    %v483 = vld [vmem:[#allocation8 + $0x50] sm:$0xff]
    %v484 = vld [vmem:[#allocation8 + $0x58] sm:$0xff]
    %v485 = vld [vmem:[#allocation8 + $0x60] sm:$0xff]
    %v486 = vld [vmem:[#allocation8 + $0x68] sm:$0xff]
    %v487 = vld [vmem:[#allocation8 + $0x70] sm:$0xff]
    %v488 = vld [vmem:[#allocation8 + $0x78] sm:$0xff]
    %v489 = vld [vmem:[#allocation8 + $0x80] sm:$0xff]
    %v490 = vld [vmem:[#allocation8 + $0x88] sm:$0xff]
    %v491 = vld [vmem:[#allocation8 + $0x90] sm:$0xff]
    %v492 = vld [vmem:[#allocation8 + $0x98] sm:$0xff]
    %v493 = vld [vmem:[#allocation8 + $0xa0] sm:$0xff]
    %v494 = vld [vmem:[#allocation8 + $0xa8] sm:$0xff]
    %v495 = vld [vmem:[#allocation8 + $0xb0] sm:$0xff]
    %v496 = vld [vmem:[#allocation8 + $0xb8] sm:$0xff]
    %v497 = vld [vmem:[#allocation8 + $0xc0] sm:$0xff]
    %v498 = vld [vmem:[#allocation8 + $0xc8] sm:$0xff]
    %v499 = vld [vmem:[#allocation8 + $0xd0] sm:$0xff]
    %v500 = vld [vmem:[#allocation8 + $0xd8] sm:$0xff]
    %v501 = vld [vmem:[#allocation8 + $0xe0] sm:$0xff]
    %v502 = vld [vmem:[#allocation8 + $0xe8] sm:$0xff]
    %v503 = vld [vmem:[#allocation8 + $0xf0] sm:$0xff]
    %v504 = vld [vmem:[#allocation8 + $0xf8] sm:$0xff]
    %v505 = vld [vmem:[#allocation8 + $0x100] sm:$0xff]
    %v506 = vld [vmem:[#allocation8 + $0x108] sm:$0xff]
    %v507 = vld [vmem:[#allocation8 + $0x110] sm:$0xff]
    %v508 = vld [vmem:[#allocation8 + $0x118] sm:$0xff]
    %v509 = vld [vmem:[#allocation8 + $0x120] sm:$0xff]
    %v510 = vld [vmem:[#allocation8 + $0x128] sm:$0xff]
    %v511 = vld [vmem:[#allocation8 + $0x130] sm:$0xff]
    %v512 = vld [vmem:[#allocation8 + $0x138] sm:$0xff]
    %v513 = vld [vmem:[#allocation8 + $0x140] sm:$0xff]
    %v514 = vld [vmem:[#allocation8 + $0x148] sm:$0xff]
    %v515 = vld [vmem:[#allocation8 + $0x150] sm:$0xff]
    %v516 = vld [vmem:[#allocation8 + $0x158] sm:$0xff]
    %v517 = vld [vmem:[#allocation8 + $0x160] sm:$0xff]
    %v518 = vld [vmem:[#allocation8 + $0x168] sm:$0xff]
    %v519 = vld [vmem:[#allocation8 + $0x170] sm:$0xff]
    %v520 = vld [vmem:[#allocation8 + $0x178] sm:$0xff]
    %v521 = vld [vmem:[#allocation8 + $0x180] sm:$0xff]
    %v522 = vld [vmem:[#allocation8 + $0x188] sm:$0xff]
    %v523 = vld [vmem:[#allocation8 + $0x190] sm:$0xff]
    %v524 = vld [vmem:[#allocation8 + $0x198] sm:$0xff]
    %v525 = vld [vmem:[#allocation8 + $0x1a0] sm:$0xff]
    %v526 = vld [vmem:[#allocation8 + $0x1a8] sm:$0xff]
    %v527 = vld [vmem:[#allocation8 + $0x1b0] sm:$0xff]
    %v528 = vld [vmem:[#allocation8 + $0x1b8] sm:$0xff]
    %v529 = vld [vmem:[#allocation8 + $0x1c0] sm:$0xff]
    %v530 = vld [vmem:[#allocation8 + $0x1c8] sm:$0xff]
    %v531 = vld [vmem:[#allocation8 + $0x1d0] sm:$0xff]
    %v532 = vld [vmem:[#allocation8 + $0x1d8] sm:$0xff]
    %v533 = vld [vmem:[#allocation8 + $0x1e0] sm:$0xff]
    %v534 = vld [vmem:[#allocation8 + $0x1e8] sm:$0xff]
    %v535 = vld [vmem:[#allocation8 + $0x1f0] sm:$0xff]
    %v536 = vld [vmem:[#allocation8 + $0x1f8] sm:$0xff]
    %v537 = vld [vmem:[#allocation8 + $0x200] sm:$0xff]
    %v538 = vld [vmem:[#allocation8 + $0x208] sm:$0xff]
    %v539 = vld [vmem:[#allocation8 + $0x210] sm:$0xff]
    %v540 = vld [vmem:[#allocation8 + $0x218] sm:$0xff]
    %v541 = vld [vmem:[#allocation8 + $0x220] sm:$0xff]
    %v542 = vld [vmem:[#allocation8 + $0x228] sm:$0xff]
    %v543 = vld [vmem:[#allocation8 + $0x230] sm:$0xff]
    %v544 = vld [vmem:[#allocation8 + $0x238] sm:$0xff]
    %v545 = vld [vmem:[#allocation8 + $0x240] sm:$0xff]
    %v546 = vld [vmem:[#allocation8 + $0x248] sm:$0xff]
    %v547 = vld [vmem:[#allocation8 + $0x250] sm:$0xff]
    %v548 = vld [vmem:[#allocation8 + $0x258] sm:$0xff]
    %v549 = vld [vmem:[#allocation8 + $0x260] sm:$0xff]
    %v550 = vld [vmem:[#allocation8 + $0x268] sm:$0xff]
    %v551 = vld [vmem:[#allocation8 + $0x270] sm:$0xff]
    %v552 = vld [vmem:[#allocation8 + $0x278] sm:$0xff]
    %v553 = vld [vmem:[#allocation8 + $0x280] sm:$0xff]
    %v554 = vld [vmem:[#allocation8 + $0x288] sm:$0xff]
    %v555 = vld [vmem:[#allocation8 + $0x290] sm:$0xff]
    %v556 = vld [vmem:[#allocation8 + $0x298] sm:$0xff]
    %v557 = vld [vmem:[#allocation8 + $0x2a0] sm:$0xff]
    %v558 = vld [vmem:[#allocation8 + $0x2a8] sm:$0xff]
    %v559 = vld [vmem:[#allocation8 + $0x2b0] sm:$0xff]
    %v560 = vld [vmem:[#allocation8 + $0x2b8] sm:$0xff]
    %v561 = vld [vmem:[#allocation8 + $0x2c0] sm:$0xff]
    %v562 = vld [vmem:[#allocation8 + $0x2c8] sm:$0xff]
    %v563 = vld [vmem:[#allocation8 + $0x2d0] sm:$0xff]
    %v564 = vld [vmem:[#allocation8 + $0x2d8] sm:$0xff]
    %v565 = vld [vmem:[#allocation8 + $0x2e0] sm:$0xff]
    %v566 = vld [vmem:[#allocation8 + $0x2e8] sm:$0xff]
    %v567 = vld [vmem:[#allocation8 + $0x2f0] sm:$0xff]
    %v568 = vld [vmem:[#allocation8 + $0x2f8] sm:$0xff]
    %v569 = vld [vmem:[#allocation8 + $0x300] sm:$0xff]
    %v570 = vld [vmem:[#allocation8 + $0x308] sm:$0xff]
    %v571 = vld [vmem:[#allocation8 + $0x310] sm:$0xff]
    %v572 = vld [vmem:[#allocation8 + $0x318] sm:$0xff]
    %v573 = vld [vmem:[#allocation8 + $0x320] sm:$0xff]
    %v574 = vld [vmem:[#allocation8 + $0x328] sm:$0xff]
    %v575 = vld [vmem:[#allocation8 + $0x330] sm:$0xff]
    %v576 = vld [vmem:[#allocation8 + $0x338] sm:$0xff]
    %v577 = vld [vmem:[#allocation8 + $0x340] sm:$0xff]
    %v578 = vld [vmem:[#allocation8 + $0x348] sm:$0xff]
    %v579 = vld [vmem:[#allocation8 + $0x350] sm:$0xff]
    %v580 = vld [vmem:[#allocation8 + $0x358] sm:$0xff]
    %v581 = vld [vmem:[#allocation8 + $0x360] sm:$0xff]
    %v582 = vld [vmem:[#allocation8 + $0x368] sm:$0xff]
    %v583 = vld [vmem:[#allocation8 + $0x370] sm:$0xff]
    %v584 = vld [vmem:[#allocation8 + $0x378] sm:$0xff]
    %v585 = vld [vmem:[#allocation8 + $0x380] sm:$0xff]
    %v586 = vld [vmem:[#allocation8 + $0x388] sm:$0xff]
    %v587 = vld [vmem:[#allocation8 + $0x390] sm:$0xff]
    %v588 = vld [vmem:[#allocation8 + $0x398] sm:$0xff]
    %v589 = vld [vmem:[#allocation8 + $0x3a0] sm:$0xff]
    %v590 = vld [vmem:[#allocation8 + $0x3a8] sm:$0xff]
    %v591 = vld [vmem:[#allocation8 + $0x3b0] sm:$0xff]
    %v592 = vld [vmem:[#allocation8 + $0x3b8] sm:$0xff]
    %v593 = vld [vmem:[#allocation8 + $0x3c0] sm:$0xff]
    %v594 = vld [vmem:[#allocation8 + $0x3c8] sm:$0xff]
    %v595 = vld [vmem:[#allocation8 + $0x3d0] sm:$0xff]
    %v596 = vld [vmem:[#allocation8 + $0x3d8] sm:$0xff]
    %v597 = vld [vmem:[#allocation8 + $0x3e0] sm:$0xff]
    %v598 = vld [vmem:[#allocation8 + $0x3e8] sm:$0xff]
    %v599 = vld [vmem:[#allocation8 + $0x3f0] sm:$0xff]
    %v600 = vld [vmem:[#allocation8 + $0x3f8] sm:$0xff]
    %v601 = vld [vmem:[#allocation10] sm:$0xf]
    %v603 = vlaneseq
    %v604 = vshrl.u32 %v603, 7
    %v605 = vsub.s32 0, %v604
    %v606 = vrot.slane %v601, %v605
    %v607 = vlaneseq
    %v608 = vshrl.u32 %v607, 7
    %v609 = vsub.s32 1, %v608
    %v610 = vrot.slane %v601, %v609
    %v611 = vlaneseq
    %v612 = vshrl.u32 %v611, 7
    %v613 = vsub.s32 2, %v612
    %v614 = vrot.slane %v601, %v613
    %v615 = vlaneseq
    %v616 = vshrl.u32 %v615, 7
    %v617 = vsub.s32 3, %v616
    %v618 = vrot.slane %v601, %v617
    %v751 = vunpack.c.l.b16 %v473
    %v752 = vunpack.c.h.b16 %v473
    %v753 = vunpack.c.l.b16 %v474
    %v754 = vunpack.c.h.b16 %v474
    %v755 = vunpack.c.l.b16 %v475
    %v756 = vunpack.c.h.b16 %v475
    %v757 = vunpack.c.l.b16 %v476
    %v758 = vunpack.c.h.b16 %v476
    %v759 = vunpack.c.l.b16 %v477
    %v760 = vunpack.c.h.b16 %v477
    %v761 = vunpack.c.l.b16 %v478
    %v762 = vunpack.c.h.b16 %v478
    %v763 = vunpack.c.l.b16 %v479
    %v764 = vunpack.c.h.b16 %v479
    %v765 = vunpack.c.l.b16 %v480
    %v766 = vunpack.c.h.b16 %v480
    %v767 = vunpack.c.l.b16 %v481
    %v768 = vunpack.c.h.b16 %v481
    %v769 = vunpack.c.l.b16 %v482
    %v770 = vunpack.c.h.b16 %v482
    %v771 = vunpack.c.l.b16 %v483
    %v772 = vunpack.c.h.b16 %v483
    %v773 = vunpack.c.l.b16 %v484
    %v774 = vunpack.c.h.b16 %v484
    %v775 = vunpack.c.l.b16 %v485
    %v776 = vunpack.c.h.b16 %v485
    %v777 = vunpack.c.l.b16 %v486
    %v778 = vunpack.c.h.b16 %v486
    %v779 = vunpack.c.l.b16 %v487
    %v780 = vunpack.c.h.b16 %v487
    %v781 = vunpack.c.l.b16 %v488
    %v782 = vunpack.c.h.b16 %v488
    %v783 = vunpack.c.l.b16 %v489
    %v784 = vunpack.c.h.b16 %v489
    %v785 = vunpack.c.l.b16 %v490
    %v786 = vunpack.c.h.b16 %v490
    %v787 = vunpack.c.l.b16 %v491
    %v788 = vunpack.c.h.b16 %v491
    %v789 = vunpack.c.l.b16 %v492
    %v790 = vunpack.c.h.b16 %v492
    %v791 = vunpack.c.l.b16 %v493
    %v792 = vunpack.c.h.b16 %v493
    %v793 = vunpack.c.l.b16 %v494
    %v794 = vunpack.c.h.b16 %v494
    %v795 = vunpack.c.l.b16 %v495
    %v796 = vunpack.c.h.b16 %v495
    %v797 = vunpack.c.l.b16 %v496
    %v798 = vunpack.c.h.b16 %v496
    %v799 = vunpack.c.l.b16 %v497
    %v800 = vunpack.c.h.b16 %v497
    %v801 = vunpack.c.l.b16 %v498
    %v802 = vunpack.c.h.b16 %v498
    %v803 = vunpack.c.l.b16 %v499
    %v804 = vunpack.c.h.b16 %v499
    %v805 = vunpack.c.l.b16 %v500
    %v806 = vunpack.c.h.b16 %v500
    %v807 = vunpack.c.l.b16 %v501
    %v808 = vunpack.c.h.b16 %v501
    %v809 = vunpack.c.l.b16 %v502
    %v810 = vunpack.c.h.b16 %v502
    %v811 = vunpack.c.l.b16 %v503
    %v812 = vunpack.c.h.b16 %v503
    %v813 = vunpack.c.l.b16 %v504
    %v814 = vunpack.c.h.b16 %v504
    %v815 = vunpack.c.l.b16 %v505
    %v816 = vunpack.c.h.b16 %v505
    %v817 = vunpack.c.l.b16 %v506
    %v818 = vunpack.c.h.b16 %v506
    %v819 = vunpack.c.l.b16 %v507
    %v820 = vunpack.c.h.b16 %v507
    %v821 = vunpack.c.l.b16 %v508
    %v822 = vunpack.c.h.b16 %v508
    %v823 = vunpack.c.l.b16 %v509
    %v824 = vunpack.c.h.b16 %v509
    %v825 = vunpack.c.l.b16 %v510
    %v826 = vunpack.c.h.b16 %v510
    %v827 = vunpack.c.l.b16 %v511
    %v828 = vunpack.c.h.b16 %v511
    %v829 = vunpack.c.l.b16 %v512
    %v830 = vunpack.c.h.b16 %v512
    %v831 = vunpack.c.l.b16 %v513
    %v832 = vunpack.c.h.b16 %v513
    %v833 = vunpack.c.l.b16 %v514
    %v834 = vunpack.c.h.b16 %v514
    %v835 = vunpack.c.l.b16 %v515
    %v836 = vunpack.c.h.b16 %v515
    %v837 = vunpack.c.l.b16 %v516
    %v838 = vunpack.c.h.b16 %v516
    %v839 = vunpack.c.l.b16 %v517
    %v840 = vunpack.c.h.b16 %v517
    %v841 = vunpack.c.l.b16 %v518
    %v842 = vunpack.c.h.b16 %v518
    %v843 = vunpack.c.l.b16 %v519
    %v844 = vunpack.c.h.b16 %v519
    %v845 = vunpack.c.l.b16 %v520
    %v846 = vunpack.c.h.b16 %v520
    %v847 = vunpack.c.l.b16 %v521
    %v848 = vunpack.c.h.b16 %v521
    %v849 = vunpack.c.l.b16 %v522
    %v850 = vunpack.c.h.b16 %v522
    %v851 = vunpack.c.l.b16 %v523
    %v852 = vunpack.c.h.b16 %v523
    %v853 = vunpack.c.l.b16 %v524
    %v854 = vunpack.c.h.b16 %v524
    %v855 = vunpack.c.l.b16 %v525
    %v856 = vunpack.c.h.b16 %v525
    %v857 = vunpack.c.l.b16 %v526
    %v858 = vunpack.c.h.b16 %v526
    %v859 = vunpack.c.l.b16 %v527
    %v860 = vunpack.c.h.b16 %v527
    %v861 = vunpack.c.l.b16 %v528
    %v862 = vunpack.c.h.b16 %v528
    %v863 = vunpack.c.l.b16 %v529
    %v864 = vunpack.c.h.b16 %v529
    %v865 = vunpack.c.l.b16 %v530
    %v866 = vunpack.c.h.b16 %v530
    %v867 = vunpack.c.l.b16 %v531
    %v868 = vunpack.c.h.b16 %v531
    %v869 = vunpack.c.l.b16 %v532
    %v870 = vunpack.c.h.b16 %v532
    %v871 = vunpack.c.l.b16 %v533
    %v872 = vunpack.c.h.b16 %v533
    %v873 = vunpack.c.l.b16 %v534
    %v874 = vunpack.c.h.b16 %v534
    %v875 = vunpack.c.l.b16 %v535
    %v876 = vunpack.c.h.b16 %v535
    %v877 = vunpack.c.l.b16 %v536
    %v878 = vunpack.c.h.b16 %v536
    %v879 = vunpack.c.l.b16 %v537
    %v880 = vunpack.c.h.b16 %v537
    %v881 = vunpack.c.l.b16 %v538
    %v882 = vunpack.c.h.b16 %v538
    %v883 = vunpack.c.l.b16 %v539
    %v884 = vunpack.c.h.b16 %v539
    %v885 = vunpack.c.l.b16 %v540
    %v886 = vunpack.c.h.b16 %v540
    %v887 = vunpack.c.l.b16 %v541
    %v888 = vunpack.c.h.b16 %v541
    %v889 = vunpack.c.l.b16 %v542
    %v890 = vunpack.c.h.b16 %v542
    %v891 = vunpack.c.l.b16 %v543
    %v892 = vunpack.c.h.b16 %v543
    %v893 = vunpack.c.l.b16 %v544
    %v894 = vunpack.c.h.b16 %v544
    %v895 = vunpack.c.l.b16 %v545
    %v896 = vunpack.c.h.b16 %v545
    %v897 = vunpack.c.l.b16 %v546
    %v898 = vunpack.c.h.b16 %v546
    %v899 = vunpack.c.l.b16 %v547
    %v900 = vunpack.c.h.b16 %v547
    %v901 = vunpack.c.l.b16 %v548
    %v902 = vunpack.c.h.b16 %v548
    %v903 = vunpack.c.l.b16 %v549
    %v904 = vunpack.c.h.b16 %v549
    %v905 = vunpack.c.l.b16 %v550
    %v906 = vunpack.c.h.b16 %v550
    %v907 = vunpack.c.l.b16 %v551
    %v908 = vunpack.c.h.b16 %v551
    %v909 = vunpack.c.l.b16 %v552
    %v910 = vunpack.c.h.b16 %v552
    %v911 = vunpack.c.l.b16 %v553
    %v912 = vunpack.c.h.b16 %v553
    %v913 = vunpack.c.l.b16 %v554
    %v914 = vunpack.c.h.b16 %v554
    %v915 = vunpack.c.l.b16 %v555
    %v916 = vunpack.c.h.b16 %v555
    %v917 = vunpack.c.l.b16 %v556
    %v918 = vunpack.c.h.b16 %v556
    %v919 = vunpack.c.l.b16 %v557
    %v920 = vunpack.c.h.b16 %v557
    %v921 = vunpack.c.l.b16 %v558
    %v922 = vunpack.c.h.b16 %v558
    %v923 = vunpack.c.l.b16 %v559
    %v924 = vunpack.c.h.b16 %v559
    %v925 = vunpack.c.l.b16 %v560
    %v926 = vunpack.c.h.b16 %v560
    %v927 = vunpack.c.l.b16 %v561
    %v928 = vunpack.c.h.b16 %v561
    %v929 = vunpack.c.l.b16 %v562
    %v930 = vunpack.c.h.b16 %v562
    %v931 = vunpack.c.l.b16 %v563
    %v932 = vunpack.c.h.b16 %v563
    %v933 = vunpack.c.l.b16 %v564
    %v934 = vunpack.c.h.b16 %v564
    %v935 = vunpack.c.l.b16 %v565
    %v936 = vunpack.c.h.b16 %v565
    %v937 = vunpack.c.l.b16 %v566
    %v938 = vunpack.c.h.b16 %v566
    %v939 = vunpack.c.l.b16 %v567
    %v940 = vunpack.c.h.b16 %v567
    %v941 = vunpack.c.l.b16 %v568
    %v942 = vunpack.c.h.b16 %v568
    %v943 = vunpack.c.l.b16 %v569
    %v944 = vunpack.c.h.b16 %v569
    %v945 = vunpack.c.l.b16 %v570
    %v946 = vunpack.c.h.b16 %v570
    %v947 = vunpack.c.l.b16 %v571
    %v948 = vunpack.c.h.b16 %v571
    %v949 = vunpack.c.l.b16 %v572
    %v950 = vunpack.c.h.b16 %v572
    %v951 = vunpack.c.l.b16 %v573
    %v952 = vunpack.c.h.b16 %v573
    %v953 = vunpack.c.l.b16 %v574
    %v954 = vunpack.c.h.b16 %v574
    %v955 = vunpack.c.l.b16 %v575
    %v956 = vunpack.c.h.b16 %v575
    %v957 = vunpack.c.l.b16 %v576
    %v958 = vunpack.c.h.b16 %v576
    %v959 = vunpack.c.l.b16 %v577
    %v960 = vunpack.c.h.b16 %v577
    %v961 = vunpack.c.l.b16 %v578
    %v962 = vunpack.c.h.b16 %v578
    %v963 = vunpack.c.l.b16 %v579
    %v964 = vunpack.c.h.b16 %v579
    %v965 = vunpack.c.l.b16 %v580
    %v966 = vunpack.c.h.b16 %v580
    %v967 = vunpack.c.l.b16 %v581
    %v968 = vunpack.c.h.b16 %v581
    %v969 = vunpack.c.l.b16 %v582
    %v970 = vunpack.c.h.b16 %v582
    %v971 = vunpack.c.l.b16 %v583
    %v972 = vunpack.c.h.b16 %v583
    %v973 = vunpack.c.l.b16 %v584
    %v974 = vunpack.c.h.b16 %v584
    %v975 = vunpack.c.l.b16 %v585
    %v976 = vunpack.c.h.b16 %v585
    %v977 = vunpack.c.l.b16 %v586
    %v978 = vunpack.c.h.b16 %v586
    %v979 = vunpack.c.l.b16 %v587
    %v980 = vunpack.c.h.b16 %v587
    %v981 = vunpack.c.l.b16 %v588
    %v982 = vunpack.c.h.b16 %v588
    %v983 = vunpack.c.l.b16 %v589
    %v984 = vunpack.c.h.b16 %v589
    %v985 = vunpack.c.l.b16 %v590
    %v986 = vunpack.c.h.b16 %v590
    %v987 = vunpack.c.l.b16 %v591
    %v988 = vunpack.c.h.b16 %v591
    %v989 = vunpack.c.l.b16 %v592
    %v990 = vunpack.c.h.b16 %v592
    %v991 = vunpack.c.l.b16 %v593
    %v992 = vunpack.c.h.b16 %v593
    %v993 = vunpack.c.l.b16 %v594
    %v994 = vunpack.c.h.b16 %v594
    %v995 = vunpack.c.l.b16 %v595
    %v996 = vunpack.c.h.b16 %v595
    %v997 = vunpack.c.l.b16 %v596
    %v998 = vunpack.c.h.b16 %v596
    %v999 = vunpack.c.l.b16 %v597
    %v1000 = vunpack.c.h.b16 %v597
    %v1001 = vunpack.c.l.b16 %v598
    %v1002 = vunpack.c.h.b16 %v598
    %v1003 = vunpack.c.l.b16 %v599
    %v1004 = vunpack.c.h.b16 %v599
    %v1005 = vunpack.c.l.b16 %v600
    %v1006 = vunpack.c.h.b16 %v600
    %v1007 = vpack.c.b16 %v755, %v751
    %v1008 = vpack.c.b16 %v756, %v752
    %v1009 = vpack.c.b16 %v757, %v753
    %v1010 = vpack.c.b16 %v758, %v754
    %v1011 = vpack.c.b16 %v763, %v759
    %v1012 = vpack.c.b16 %v764, %v760
    %v1013 = vpack.c.b16 %v765, %v761
    %v1014 = vpack.c.b16 %v766, %v762
    %v1015 = vpack.c.b16 %v771, %v767
    %v1016 = vpack.c.b16 %v772, %v768
    %v1017 = vpack.c.b16 %v773, %v769
    %v1018 = vpack.c.b16 %v774, %v770
    %v1019 = vpack.c.b16 %v779, %v775
    %v1020 = vpack.c.b16 %v780, %v776
    %v1021 = vpack.c.b16 %v781, %v777
    %v1022 = vpack.c.b16 %v782, %v778
    %v1023 = vpack.c.b16 %v787, %v783
    %v1024 = vpack.c.b16 %v788, %v784
    %v1025 = vpack.c.b16 %v789, %v785
    %v1026 = vpack.c.b16 %v790, %v786
    %v1027 = vpack.c.b16 %v795, %v791
    %v1028 = vpack.c.b16 %v796, %v792
    %v1029 = vpack.c.b16 %v797, %v793
    %v1030 = vpack.c.b16 %v798, %v794
    %v1031 = vpack.c.b16 %v803, %v799
    %v1032 = vpack.c.b16 %v804, %v800
    %v1033 = vpack.c.b16 %v805, %v801
    %v1034 = vpack.c.b16 %v806, %v802
    %v1035 = vpack.c.b16 %v811, %v807
    %v1036 = vpack.c.b16 %v812, %v808
    %v1037 = vpack.c.b16 %v813, %v809
    %v1038 = vpack.c.b16 %v814, %v810
    %v1039 = vpack.c.b16 %v819, %v815
    %v1040 = vpack.c.b16 %v820, %v816
    %v1041 = vpack.c.b16 %v821, %v817
    %v1042 = vpack.c.b16 %v822, %v818
    %v1043 = vpack.c.b16 %v827, %v823
    %v1044 = vpack.c.b16 %v828, %v824
    %v1045 = vpack.c.b16 %v829, %v825
    %v1046 = vpack.c.b16 %v830, %v826
    %v1047 = vpack.c.b16 %v835, %v831
    %v1048 = vpack.c.b16 %v836, %v832
    %v1049 = vpack.c.b16 %v837, %v833
    %v1050 = vpack.c.b16 %v838, %v834
    %v1051 = vpack.c.b16 %v843, %v839
    %v1052 = vpack.c.b16 %v844, %v840
    %v1053 = vpack.c.b16 %v845, %v841
    %v1054 = vpack.c.b16 %v846, %v842
    %v1055 = vpack.c.b16 %v851, %v847
    %v1056 = vpack.c.b16 %v852, %v848
    %v1057 = vpack.c.b16 %v853, %v849
    %v1058 = vpack.c.b16 %v854, %v850
    %v1059 = vpack.c.b16 %v859, %v855
    %v1060 = vpack.c.b16 %v860, %v856
    %v1061 = vpack.c.b16 %v861, %v857
    %v1062 = vpack.c.b16 %v862, %v858
    %v1063 = vpack.c.b16 %v867, %v863
    %v1064 = vpack.c.b16 %v868, %v864
    %v1065 = vpack.c.b16 %v869, %v865
    %v1066 = vpack.c.b16 %v870, %v866
    %v1067 = vpack.c.b16 %v875, %v871
    %v1068 = vpack.c.b16 %v876, %v872
    %v1069 = vpack.c.b16 %v877, %v873
    %v1070 = vpack.c.b16 %v878, %v874
    %v1071 = vpack.c.b16 %v883, %v879
    %v1072 = vpack.c.b16 %v884, %v880
    %v1073 = vpack.c.b16 %v885, %v881
    %v1074 = vpack.c.b16 %v886, %v882
    %v1075 = vpack.c.b16 %v891, %v887
    %v1076 = vpack.c.b16 %v892, %v888
    %v1077 = vpack.c.b16 %v893, %v889
    %v1078 = vpack.c.b16 %v894, %v890
    %v1079 = vpack.c.b16 %v899, %v895
    %v1080 = vpack.c.b16 %v900, %v896
    %v1081 = vpack.c.b16 %v901, %v897
    %v1082 = vpack.c.b16 %v902, %v898
    %v1083 = vpack.c.b16 %v907, %v903
    %v1084 = vpack.c.b16 %v908, %v904
    %v1085 = vpack.c.b16 %v909, %v905
    %v1086 = vpack.c.b16 %v910, %v906
    %v1087 = vpack.c.b16 %v915, %v911
    %v1088 = vpack.c.b16 %v916, %v912
    %v1089 = vpack.c.b16 %v917, %v913
    %v1090 = vpack.c.b16 %v918, %v914
    %v1091 = vpack.c.b16 %v923, %v919
    %v1092 = vpack.c.b16 %v924, %v920
    %v1093 = vpack.c.b16 %v925, %v921
    %v1094 = vpack.c.b16 %v926, %v922
    %v1095 = vpack.c.b16 %v931, %v927
    %v1096 = vpack.c.b16 %v932, %v928
    %v1097 = vpack.c.b16 %v933, %v929
    %v1098 = vpack.c.b16 %v934, %v930
    %v1099 = vpack.c.b16 %v939, %v935
    %v1100 = vpack.c.b16 %v940, %v936
    %v1101 = vpack.c.b16 %v941, %v937
    %v1102 = vpack.c.b16 %v942, %v938
    %v1103 = vpack.c.b16 %v947, %v943
    %v1104 = vpack.c.b16 %v948, %v944
    %v1105 = vpack.c.b16 %v949, %v945
    %v1106 = vpack.c.b16 %v950, %v946
    %v1107 = vpack.c.b16 %v955, %v951
    %v1108 = vpack.c.b16 %v956, %v952
    %v1109 = vpack.c.b16 %v957, %v953
    %v1110 = vpack.c.b16 %v958, %v954
    %v1111 = vpack.c.b16 %v963, %v959
    %v1112 = vpack.c.b16 %v964, %v960
    %v1113 = vpack.c.b16 %v965, %v961
    %v1114 = vpack.c.b16 %v966, %v962
    %v1115 = vpack.c.b16 %v971, %v967
    %v1116 = vpack.c.b16 %v972, %v968
    %v1117 = vpack.c.b16 %v973, %v969
    %v1118 = vpack.c.b16 %v974, %v970
    %v1119 = vpack.c.b16 %v979, %v975
    %v1120 = vpack.c.b16 %v980, %v976
    %v1121 = vpack.c.b16 %v981, %v977
    %v1122 = vpack.c.b16 %v982, %v978
    %v1123 = vpack.c.b16 %v987, %v983
    %v1124 = vpack.c.b16 %v988, %v984
    %v1125 = vpack.c.b16 %v989, %v985
    %v1126 = vpack.c.b16 %v990, %v986
    %v1127 = vpack.c.b16 %v995, %v991
    %v1128 = vpack.c.b16 %v996, %v992
    %v1129 = vpack.c.b16 %v997, %v993
    %v1130 = vpack.c.b16 %v998, %v994
    %v1131 = vpack.c.b16 %v1003, %v999
    %v1132 = vpack.c.b16 %v1004, %v1000
    %v1133 = vpack.c.b16 %v1005, %v1001
    %v1134 = vpack.c.b16 %v1006, %v1002
    %1263 = vmatprep.subr.bf16.mxu0 %v1036
    %1264 = vmatpush1.bf16.msra.mxu0 %v1035
    %1265 = vmatprep.subr.bf16.mxu0 %v1032
    %1266 = vmatpush1.bf16.msra.mxu0 %v1031
    %1267 = vmatprep.subr.bf16.mxu0 %v1028
    %1268 = vmatpush1.bf16.msra.mxu0 %v1027
    %1269 = vmatprep.subr.bf16.mxu0 %v1024
    %1270 = vmatpush1.bf16.msra.mxu0 %v1023
    %1271 = vmatprep.subr.bf16.mxu0 %v1020
    %1272 = vmatpush1.bf16.msra.mxu0 %v1019
    %1273 = vmatprep.subr.bf16.mxu0 %v1016
    %1274 = vmatpush1.bf16.msra.mxu0 %v1015
    %1275 = vmatprep.subr.bf16.mxu0 %v1012
    %1276 = vmatpush1.bf16.msra.mxu0 %v1011
    %1277 = vmatprep.subr.bf16.mxu0 %v1008
    %1278 = vmatpush1.bf16.msra.mxu0 %v1007
    %1279 = vmatprep.subr.bf16.mxu0 %v1068
    %1280 = vmatpush2.bf16.msra.mxu0 %v1067
    %1281 = vmatprep.subr.bf16.mxu0 %v1064
    %1282 = vmatpush2.bf16.msra.mxu0 %v1063
    %1283 = vmatprep.subr.bf16.mxu0 %v1060
    %1284 = vmatpush2.bf16.msra.mxu0 %v1059
    %1285 = vmatprep.subr.bf16.mxu0 %v1056
    %1286 = vmatpush2.bf16.msra.mxu0 %v1055
    %1287 = vmatprep.subr.bf16.mxu0 %v1052
    %1288 = vmatpush2.bf16.msra.mxu0 %v1051
    %1289 = vmatprep.subr.bf16.mxu0 %v1048
    %1290 = vmatpush2.bf16.msra.mxu0 %v1047
    %1291 = vmatprep.subr.bf16.mxu0 %v1044
    %1292 = vmatpush2.bf16.msra.mxu0 %v1043
    %1293 = vmatprep.subr.bf16.mxu0 %v1040
    %1294 = vmatpush2.bf16.msra.mxu0 %v1039
    %1295 = vmatprep.mubr.bf16.mxu0 %v470
    %1296 = vmatmul.mubr.bf16.gmra.mxu0 %v469
    %v1297 = vpop.f32.mrf.mxu0
    %v1298 = vadd.f32 %v606, %v1297
    %v1299 = vpop.f32.mrf.mxu0
    %v1300 = vadd.f32 %v610, %v1299
    %v1301 = vpop.f32.mrf.mxu0
    %v1302 = vadd.f32 %v606, %v1301
    %v1303 = vpop.f32.mrf.mxu0
    %v1304 = vadd.f32 %v610, %v1303
    %1305 = vdwg.mxu0
    %1306 = vmatprep.subr.bf16.mxu0 %v1100
    %1307 = vmatpush1.bf16.msra.mxu0 %v1099
    %1308 = vmatprep.subr.bf16.mxu0 %v1096
    %1309 = vmatpush1.bf16.msra.mxu0 %v1095
    %1310 = vmatprep.subr.bf16.mxu0 %v1092
    %1311 = vmatpush1.bf16.msra.mxu0 %v1091
    %1312 = vmatprep.subr.bf16.mxu0 %v1088
    %1313 = vmatpush1.bf16.msra.mxu0 %v1087
    %1314 = vmatprep.subr.bf16.mxu0 %v1084
    %1315 = vmatpush1.bf16.msra.mxu0 %v1083
    %1316 = vmatprep.subr.bf16.mxu0 %v1080
    %1317 = vmatpush1.bf16.msra.mxu0 %v1079
    %1318 = vmatprep.subr.bf16.mxu0 %v1076
    %1319 = vmatpush1.bf16.msra.mxu0 %v1075
    %1320 = vmatprep.subr.bf16.mxu0 %v1072
    %1321 = vmatpush1.bf16.msra.mxu0 %v1071
    %1322 = vmatprep.subr.bf16.mxu0 %v1132
    %1323 = vmatpush2.bf16.msra.mxu0 %v1131
    %1324 = vmatprep.subr.bf16.mxu0 %v1128
    %1325 = vmatpush2.bf16.msra.mxu0 %v1127
    %1326 = vmatprep.subr.bf16.mxu0 %v1124
    %1327 = vmatpush2.bf16.msra.mxu0 %v1123
    %1328 = vmatprep.subr.bf16.mxu0 %v1120
    %1329 = vmatpush2.bf16.msra.mxu0 %v1119
    %1330 = vmatprep.subr.bf16.mxu0 %v1116
    %1331 = vmatpush2.bf16.msra.mxu0 %v1115
    %1332 = vmatprep.subr.bf16.mxu0 %v1112
    %1333 = vmatpush2.bf16.msra.mxu0 %v1111
    %1334 = vmatprep.subr.bf16.mxu0 %v1108
    %1335 = vmatpush2.bf16.msra.mxu0 %v1107
    %1336 = vmatprep.subr.bf16.mxu0 %v1104
    %1337 = vmatpush2.bf16.msra.mxu0 %v1103
    %1338 = vmatprep.mubr.bf16.mxu0 %v472
    %1339 = vmatmul.mubr.bf16.gmra.mxu0 %v471
    %v1340 = vpop.f32.mrf.mxu0
    %v1341 = vadd.f32 %v1298, %v1340
    %v1342 = vpop.f32.mrf.mxu0
    %v1343 = vadd.f32 %v1300, %v1342
    %v1344 = vpop.f32.mrf.mxu0
    %v1345 = vadd.f32 %v1302, %v1344
    %v1346 = vpop.f32.mrf.mxu0
    %v1347 = vadd.f32 %v1304, %v1346
    %1348 = vdwg.mxu0
    %1349 = vmatprep.subr.bf16.mxu0 %v1038
    %1350 = vmatpush1.bf16.msra.mxu0 %v1037
    %1351 = vmatprep.subr.bf16.mxu0 %v1034
    %1352 = vmatpush1.bf16.msra.mxu0 %v1033
    %1353 = vmatprep.subr.bf16.mxu0 %v1030
    %1354 = vmatpush1.bf16.msra.mxu0 %v1029
    %1355 = vmatprep.subr.bf16.mxu0 %v1026
    %1356 = vmatpush1.bf16.msra.mxu0 %v1025
    %1357 = vmatprep.subr.bf16.mxu0 %v1022
    %1358 = vmatpush1.bf16.msra.mxu0 %v1021
    %1359 = vmatprep.subr.bf16.mxu0 %v1018
    %1360 = vmatpush1.bf16.msra.mxu0 %v1017
    %1361 = vmatprep.subr.bf16.mxu0 %v1014
    %1362 = vmatpush1.bf16.msra.mxu0 %v1013
    %1363 = vmatprep.subr.bf16.mxu0 %v1010
    %1364 = vmatpush1.bf16.msra.mxu0 %v1009
    %1365 = vmatprep.subr.bf16.mxu0 %v1070
    %1366 = vmatpush2.bf16.msra.mxu0 %v1069
    %1367 = vmatprep.subr.bf16.mxu0 %v1066
    %1368 = vmatpush2.bf16.msra.mxu0 %v1065
    %1369 = vmatprep.subr.bf16.mxu0 %v1062
    %1370 = vmatpush2.bf16.msra.mxu0 %v1061
    %1371 = vmatprep.subr.bf16.mxu0 %v1058
    %1372 = vmatpush2.bf16.msra.mxu0 %v1057
    %1373 = vmatprep.subr.bf16.mxu0 %v1054
    %1374 = vmatpush2.bf16.msra.mxu0 %v1053
    %1375 = vmatprep.subr.bf16.mxu0 %v1050
    %1376 = vmatpush2.bf16.msra.mxu0 %v1049
    %1377 = vmatprep.subr.bf16.mxu0 %v1046
    %1378 = vmatpush2.bf16.msra.mxu0 %v1045
    %1379 = vmatprep.subr.bf16.mxu0 %v1042
    %1380 = vmatpush2.bf16.msra.mxu0 %v1041
    %1381 = vmatprep.mubr.bf16.mxu0 %v470
    %1382 = vmatmul.mubr.bf16.gmra.mxu0 %v469
    %v1383 = vpop.f32.mrf.mxu0
    %v1384 = vadd.f32 %v614, %v1383
    %v1385 = vpop.f32.mrf.mxu0
    %v1386 = vadd.f32 %v618, %v1385
    %v1387 = vpop.f32.mrf.mxu0
    %v1388 = vadd.f32 %v614, %v1387
    %v1389 = vpop.f32.mrf.mxu0
    %v1390 = vadd.f32 %v618, %v1389
    %1391 = vdwg.mxu0
    %1392 = vmatprep.subr.bf16.mxu0 %v1102
    %1393 = vmatpush1.bf16.msra.mxu0 %v1101
    %1394 = vmatprep.subr.bf16.mxu0 %v1098
    %1395 = vmatpush1.bf16.msra.mxu0 %v1097
    %1396 = vmatprep.subr.bf16.mxu0 %v1094
    %1397 = vmatpush1.bf16.msra.mxu0 %v1093
    %1398 = vmatprep.subr.bf16.mxu0 %v1090
    %1399 = vmatpush1.bf16.msra.mxu0 %v1089
    %1400 = vmatprep.subr.bf16.mxu0 %v1086
    %1401 = vmatpush1.bf16.msra.mxu0 %v1085
    %1402 = vmatprep.subr.bf16.mxu0 %v1082
    %1403 = vmatpush1.bf16.msra.mxu0 %v1081
    %1404 = vmatprep.subr.bf16.mxu0 %v1078
    %1405 = vmatpush1.bf16.msra.mxu0 %v1077
    %1406 = vmatprep.subr.bf16.mxu0 %v1074
    %1407 = vmatpush1.bf16.msra.mxu0 %v1073
    %1408 = vmatprep.subr.bf16.mxu0 %v1134
    %1409 = vmatpush2.bf16.msra.mxu0 %v1133
    %1410 = vmatprep.subr.bf16.mxu0 %v1130
    %1411 = vmatpush2.bf16.msra.mxu0 %v1129
    %1412 = vmatprep.subr.bf16.mxu0 %v1126
    %1413 = vmatpush2.bf16.msra.mxu0 %v1125
    %1414 = vmatprep.subr.bf16.mxu0 %v1122
    %1415 = vmatpush2.bf16.msra.mxu0 %v1121
    %1416 = vmatprep.subr.bf16.mxu0 %v1118
    %1417 = vmatpush2.bf16.msra.mxu0 %v1117
    %1418 = vmatprep.subr.bf16.mxu0 %v1114
    %1419 = vmatpush2.bf16.msra.mxu0 %v1113
    %1420 = vmatprep.subr.bf16.mxu0 %v1110
    %1421 = vmatpush2.bf16.msra.mxu0 %v1109
    %1422 = vmatprep.subr.bf16.mxu0 %v1106
    %1423 = vmatpush2.bf16.msra.mxu0 %v1105
    %1424 = vmatprep.mubr.bf16.mxu0 %v472
    %1425 = vmatmul.mubr.bf16.gmra.mxu0 %v471
    %v1426 = vpop.f32.mrf.mxu0
    %v1427 = vadd.f32 %v1384, %v1426
    %v1428 = vpop.f32.mrf.mxu0
    %v1429 = vadd.f32 %v1386, %v1428
    %v1430 = vpop.f32.mrf.mxu0
    %v1431 = vadd.f32 %v1388, %v1430
    %v1432 = vpop.f32.mrf.mxu0
    %v1433 = vadd.f32 %v1390, %v1432
    %1434 = vdwg.mxu0
    %v1435 = vmax.f32 %v1341, 0.0
    %v1436 = vmax.f32 %v1343, 0.0
    %v1437 = vmax.f32 %v1427, 0.0
    %v1438 = vmax.f32 %v1429, 0.0
    %v1439 = vmax.f32 %v1345, 0.0
    %v1440 = vmax.f32 %v1347, 0.0
    %v1441 = vmax.f32 %v1431, 0.0
    %v1442 = vmax.f32 %v1433, 0.0
    %v1443 = vpack.c.bf16 %v1439, %v1435
    %v1444 = vpack.c.bf16 %v1440, %v1436
    %v1445 = vpack.c.bf16 %v1441, %v1437
    %v1446 = vpack.c.bf16 %v1442, %v1438
    %v1447 = vld [vmem:[#allocation11] sm:$0xf]
    %v1448 = vld [vmem:[#allocation11 + $0x4] sm:$0xf]
    %v1449 = vld [vmem:[#allocation11 + $0x8] sm:$0xf]
    %v1450 = vld [vmem:[#allocation11 + $0xc] sm:$0xf]
    %v1451 = vld [vmem:[#allocation11 + $0x10] sm:$0xf]
    %v1452 = vld [vmem:[#allocation11 + $0x14] sm:$0xf]
    %v1453 = vld [vmem:[#allocation11 + $0x18] sm:$0xf]
    %v1454 = vld [vmem:[#allocation11 + $0x1c] sm:$0xf]
    %v1455 = vld [vmem:[#allocation11 + $0x20] sm:$0xf]
    %v1456 = vld [vmem:[#allocation11 + $0x24] sm:$0xf]
    %v1457 = vld [vmem:[#allocation11 + $0x28] sm:$0xf]
    %v1458 = vld [vmem:[#allocation11 + $0x2c] sm:$0xf]
    %v1459 = vld [vmem:[#allocation11 + $0x30] sm:$0xf]
    %v1460 = vld [vmem:[#allocation11 + $0x34] sm:$0xf]
    %v1461 = vld [vmem:[#allocation11 + $0x38] sm:$0xf]
    %v1462 = vld [vmem:[#allocation11 + $0x3c] sm:$0xf]
    %v1463 = vld [vmem:[#allocation11 + $0x40] sm:$0xf]
    %v1464 = vld [vmem:[#allocation11 + $0x44] sm:$0xf]
    %v1465 = vld [vmem:[#allocation11 + $0x48] sm:$0xf]
    %v1466 = vld [vmem:[#allocation11 + $0x4c] sm:$0xf]
    %v1467 = vld [vmem:[#allocation11 + $0x50] sm:$0xf]
    %v1468 = vld [vmem:[#allocation11 + $0x54] sm:$0xf]
    %v1469 = vld [vmem:[#allocation11 + $0x58] sm:$0xf]
    %v1470 = vld [vmem:[#allocation11 + $0x5c] sm:$0xf]
    %v1471 = vld [vmem:[#allocation11 + $0x60] sm:$0xf]
    %v1472 = vld [vmem:[#allocation11 + $0x64] sm:$0xf]
    %v1473 = vld [vmem:[#allocation11 + $0x68] sm:$0xf]
    %v1474 = vld [vmem:[#allocation11 + $0x6c] sm:$0xf]
    %v1475 = vld [vmem:[#allocation11 + $0x70] sm:$0xf]
    %v1476 = vld [vmem:[#allocation11 + $0x74] sm:$0xf]
    %v1477 = vld [vmem:[#allocation11 + $0x78] sm:$0xf]
    %v1478 = vld [vmem:[#allocation11 + $0x7c] sm:$0xf]
    %v1479 = vld [vmem:[#allocation11 + $0x80] sm:$0xf]
    %v1480 = vld [vmem:[#allocation11 + $0x84] sm:$0xf]
    %v1481 = vld [vmem:[#allocation11 + $0x88] sm:$0xf]
    %v1482 = vld [vmem:[#allocation11 + $0x8c] sm:$0xf]
    %v1483 = vld [vmem:[#allocation11 + $0x90] sm:$0xf]
    %v1484 = vld [vmem:[#allocation11 + $0x94] sm:$0xf]
    %v1485 = vld [vmem:[#allocation11 + $0x98] sm:$0xf]
    %v1486 = vld [vmem:[#allocation11 + $0x9c] sm:$0xf]
    %v1487 = vld [vmem:[#allocation11 + $0xa0] sm:$0xf]
    %v1488 = vld [vmem:[#allocation11 + $0xa4] sm:$0xf]
    %v1489 = vld [vmem:[#allocation11 + $0xa8] sm:$0xf]
    %v1490 = vld [vmem:[#allocation11 + $0xac] sm:$0xf]
    %v1491 = vld [vmem:[#allocation11 + $0xb0] sm:$0xf]
    %v1492 = vld [vmem:[#allocation11 + $0xb4] sm:$0xf]
    %v1493 = vld [vmem:[#allocation11 + $0xb8] sm:$0xf]
    %v1494 = vld [vmem:[#allocation11 + $0xbc] sm:$0xf]
    %v1495 = vld [vmem:[#allocation11 + $0xc0] sm:$0xf]
    %v1496 = vld [vmem:[#allocation11 + $0xc4] sm:$0xf]
    %v1497 = vld [vmem:[#allocation11 + $0xc8] sm:$0xf]
    %v1498 = vld [vmem:[#allocation11 + $0xcc] sm:$0xf]
    %v1499 = vld [vmem:[#allocation11 + $0xd0] sm:$0xf]
    %v1500 = vld [vmem:[#allocation11 + $0xd4] sm:$0xf]
    %v1501 = vld [vmem:[#allocation11 + $0xd8] sm:$0xf]
    %v1502 = vld [vmem:[#allocation11 + $0xdc] sm:$0xf]
    %v1503 = vld [vmem:[#allocation11 + $0xe0] sm:$0xf]
    %v1504 = vld [vmem:[#allocation11 + $0xe4] sm:$0xf]
    %v1505 = vld [vmem:[#allocation11 + $0xe8] sm:$0xf]
    %v1506 = vld [vmem:[#allocation11 + $0xec] sm:$0xf]
    %v1507 = vld [vmem:[#allocation11 + $0xf0] sm:$0xf]
    %v1508 = vld [vmem:[#allocation11 + $0xf4] sm:$0xf]
    %v1509 = vld [vmem:[#allocation11 + $0xf8] sm:$0xf]
    %v1510 = vld [vmem:[#allocation11 + $0xfc] sm:$0xf]
    %v1511 = vld [vmem:[#allocation13] sm:$0x1]
    %v1513 = vlaneseq
    %v1514 = vshrl.u32 %v1513, 7
    %v1515 = vsub.s32 0, %v1514
    %v1516 = vrot.slane %v1511, %v1515
    %v1582 = vunpack.c.l.b16 %v1447
    %v1583 = vunpack.c.l.b16 %v1448
    %v1584 = vunpack.c.l.b16 %v1449
    %v1585 = vunpack.c.l.b16 %v1450
    %v1586 = vunpack.c.l.b16 %v1451
    %v1587 = vunpack.c.l.b16 %v1452
    %v1588 = vunpack.c.l.b16 %v1453
    %v1589 = vunpack.c.l.b16 %v1454
    %v1590 = vunpack.c.l.b16 %v1455
    %v1591 = vunpack.c.l.b16 %v1456
    %v1592 = vunpack.c.l.b16 %v1457
    %v1593 = vunpack.c.l.b16 %v1458
    %v1594 = vunpack.c.l.b16 %v1459
    %v1595 = vunpack.c.l.b16 %v1460
    %v1596 = vunpack.c.l.b16 %v1461
    %v1597 = vunpack.c.l.b16 %v1462
    %v1598 = vunpack.c.l.b16 %v1463
    %v1599 = vunpack.c.l.b16 %v1464
    %v1600 = vunpack.c.l.b16 %v1465
    %v1601 = vunpack.c.l.b16 %v1466
    %v1602 = vunpack.c.l.b16 %v1467
    %v1603 = vunpack.c.l.b16 %v1468
    %v1604 = vunpack.c.l.b16 %v1469
    %v1605 = vunpack.c.l.b16 %v1470
    %v1606 = vunpack.c.l.b16 %v1471
    %v1607 = vunpack.c.l.b16 %v1472
    %v1608 = vunpack.c.l.b16 %v1473
    %v1609 = vunpack.c.l.b16 %v1474
    %v1610 = vunpack.c.l.b16 %v1475
    %v1611 = vunpack.c.l.b16 %v1476
    %v1612 = vunpack.c.l.b16 %v1477
    %v1613 = vunpack.c.l.b16 %v1478
    %v1614 = vunpack.c.l.b16 %v1479
    %v1615 = vunpack.c.l.b16 %v1480
    %v1616 = vunpack.c.l.b16 %v1481
    %v1617 = vunpack.c.l.b16 %v1482
    %v1618 = vunpack.c.l.b16 %v1483
    %v1619 = vunpack.c.l.b16 %v1484
    %v1620 = vunpack.c.l.b16 %v1485
    %v1621 = vunpack.c.l.b16 %v1486
    %v1622 = vunpack.c.l.b16 %v1487
    %v1623 = vunpack.c.l.b16 %v1488
    %v1624 = vunpack.c.l.b16 %v1489
    %v1625 = vunpack.c.l.b16 %v1490
    %v1626 = vunpack.c.l.b16 %v1491
    %v1627 = vunpack.c.l.b16 %v1492
    %v1628 = vunpack.c.l.b16 %v1493
    %v1629 = vunpack.c.l.b16 %v1494
    %v1630 = vunpack.c.l.b16 %v1495
    %v1631 = vunpack.c.l.b16 %v1496
    %v1632 = vunpack.c.l.b16 %v1497
    %v1633 = vunpack.c.l.b16 %v1498
    %v1634 = vunpack.c.l.b16 %v1499
    %v1635 = vunpack.c.l.b16 %v1500
    %v1636 = vunpack.c.l.b16 %v1501
    %v1637 = vunpack.c.l.b16 %v1502
    %v1638 = vunpack.c.l.b16 %v1503
    %v1639 = vunpack.c.l.b16 %v1504
    %v1640 = vunpack.c.l.b16 %v1505
    %v1641 = vunpack.c.l.b16 %v1506
    %v1642 = vunpack.c.l.b16 %v1507
    %v1643 = vunpack.c.l.b16 %v1508
    %v1644 = vunpack.c.l.b16 %v1509
    %v1645 = vunpack.c.l.b16 %v1510
    %v1646 = vpack.c.b16 %v1583, %v1582
    %v1647 = vpack.c.b16 %v1585, %v1584
    %v1648 = vpack.c.b16 %v1587, %v1586
    %v1649 = vpack.c.b16 %v1589, %v1588
    %v1650 = vpack.c.b16 %v1591, %v1590
    %v1651 = vpack.c.b16 %v1593, %v1592
    %v1652 = vpack.c.b16 %v1595, %v1594
    %v1653 = vpack.c.b16 %v1597, %v1596
    %v1654 = vpack.c.b16 %v1599, %v1598
    %v1655 = vpack.c.b16 %v1601, %v1600
    %v1656 = vpack.c.b16 %v1603, %v1602
    %v1657 = vpack.c.b16 %v1605, %v1604
    %v1658 = vpack.c.b16 %v1607, %v1606
    %v1659 = vpack.c.b16 %v1609, %v1608
    %v1660 = vpack.c.b16 %v1611, %v1610
    %v1661 = vpack.c.b16 %v1613, %v1612
    %v1662 = vpack.c.b16 %v1615, %v1614
    %v1663 = vpack.c.b16 %v1617, %v1616
    %v1664 = vpack.c.b16 %v1619, %v1618
    %v1665 = vpack.c.b16 %v1621, %v1620
    %v1666 = vpack.c.b16 %v1623, %v1622
    %v1667 = vpack.c.b16 %v1625, %v1624
    %v1668 = vpack.c.b16 %v1627, %v1626
    %v1669 = vpack.c.b16 %v1629, %v1628
    %v1670 = vpack.c.b16 %v1631, %v1630
    %v1671 = vpack.c.b16 %v1633, %v1632
    %v1672 = vpack.c.b16 %v1635, %v1634
    %v1673 = vpack.c.b16 %v1637, %v1636
    %v1674 = vpack.c.b16 %v1639, %v1638
    %v1675 = vpack.c.b16 %v1641, %v1640
    %v1676 = vpack.c.b16 %v1643, %v1642
    %v1677 = vpack.c.b16 %v1645, %v1644
    %1710 = vmatprep.subr.bf16.mxu0 0
    %1711 = vmatpush1.bf16.msra.mxu0 %v1653
    %1712 = vmatprep.subr.bf16.mxu0 0
    %1713 = vmatpush1.bf16.msra.mxu0 %v1652
    %1714 = vmatprep.subr.bf16.mxu0 0
    %1715 = vmatpush1.bf16.msra.mxu0 %v1651
    %1716 = vmatprep.subr.bf16.mxu0 0
    %1717 = vmatpush1.bf16.msra.mxu0 %v1650
    %1718 = vmatprep.subr.bf16.mxu0 0
    %1719 = vmatpush1.bf16.msra.mxu0 %v1649
    %1720 = vmatprep.subr.bf16.mxu0 0
    %1721 = vmatpush1.bf16.msra.mxu0 %v1648
    %1722 = vmatprep.subr.bf16.mxu0 0
    %1723 = vmatpush1.bf16.msra.mxu0 %v1647
    %1724 = vmatprep.subr.bf16.mxu0 0
    %1725 = vmatpush1.bf16.msra.mxu0 %v1646
    %1726 = vmatprep.subr.bf16.mxu0 0
    %1727 = vmatpush2.bf16.msra.mxu0 %v1661
    %1728 = vmatprep.subr.bf16.mxu0 0
    %1729 = vmatpush2.bf16.msra.mxu0 %v1660
    %1730 = vmatprep.subr.bf16.mxu0 0
    %1731 = vmatpush2.bf16.msra.mxu0 %v1659
    %1732 = vmatprep.subr.bf16.mxu0 0
    %1733 = vmatpush2.bf16.msra.mxu0 %v1658
    %1734 = vmatprep.subr.bf16.mxu0 0
    %1735 = vmatpush2.bf16.msra.mxu0 %v1657
    %1736 = vmatprep.subr.bf16.mxu0 0
    %1737 = vmatpush2.bf16.msra.mxu0 %v1656
    %1738 = vmatprep.subr.bf16.mxu0 0
    %1739 = vmatpush2.bf16.msra.mxu0 %v1655
    %1740 = vmatprep.subr.bf16.mxu0 0
    %1741 = vmatpush2.bf16.msra.mxu0 %v1654
    %1742 = vmatprep.mubr.bf16.mxu0 %v1444
    %1743 = vmatmul.mubr.bf16.gmra.mxu0 %v1443
    %v1744 = vpop.f32.mrf.mxu0
    %v1745 = vadd.f32 %v1516, %v1744
    %v1746 = vpop.f32.mrf.mxu0
    %v1747 = vpop.f32.mrf.mxu0
    %v1748 = vadd.f32 %v1516, %v1747
    %v1749 = vpop.f32.mrf.mxu0
    %1750 = vdwg.mxu0
    %1751 = vmatprep.subr.bf16.mxu0 0
    %1752 = vmatpush1.bf16.msra.mxu0 %v1669
    %1753 = vmatprep.subr.bf16.mxu0 0
    %1754 = vmatpush1.bf16.msra.mxu0 %v1668
    %1755 = vmatprep.subr.bf16.mxu0 0
    %1756 = vmatpush1.bf16.msra.mxu0 %v1667
    %1757 = vmatprep.subr.bf16.mxu0 0
    %1758 = vmatpush1.bf16.msra.mxu0 %v1666
    %1759 = vmatprep.subr.bf16.mxu0 0
    %1760 = vmatpush1.bf16.msra.mxu0 %v1665
    %1761 = vmatprep.subr.bf16.mxu0 0
    %1762 = vmatpush1.bf16.msra.mxu0 %v1664
    %1763 = vmatprep.subr.bf16.mxu0 0
    %1764 = vmatpush1.bf16.msra.mxu0 %v1663
    %1765 = vmatprep.subr.bf16.mxu0 0
    %1766 = vmatpush1.bf16.msra.mxu0 %v1662
    %1767 = vmatprep.subr.bf16.mxu0 0
    %1768 = vmatpush2.bf16.msra.mxu0 %v1677
    %1769 = vmatprep.subr.bf16.mxu0 0
    %1770 = vmatpush2.bf16.msra.mxu0 %v1676
    %1771 = vmatprep.subr.bf16.mxu0 0
    %1772 = vmatpush2.bf16.msra.mxu0 %v1675
    %1773 = vmatprep.subr.bf16.mxu0 0
    %1774 = vmatpush2.bf16.msra.mxu0 %v1674
    %1775 = vmatprep.subr.bf16.mxu0 0
    %1776 = vmatpush2.bf16.msra.mxu0 %v1673
    %1777 = vmatprep.subr.bf16.mxu0 0
    %1778 = vmatpush2.bf16.msra.mxu0 %v1672
    %1779 = vmatprep.subr.bf16.mxu0 0
    %1780 = vmatpush2.bf16.msra.mxu0 %v1671
    %1781 = vmatprep.subr.bf16.mxu0 0
    %1782 = vmatpush2.bf16.msra.mxu0 %v1670
    %1783 = vmatprep.mubr.bf16.mxu0 %v1446
    %1784 = vmatmul.mubr.bf16.gmra.mxu0 %v1445
    %v1785 = vpop.f32.mrf.mxu0
    %v1786 = vadd.f32 %v1745, %v1785
    %v1787 = vpop.f32.mrf.mxu0
    %v1788 = vpop.f32.mrf.mxu0
    %v1789 = vadd.f32 %v1748, %v1788
    %v1790 = vpop.f32.mrf.mxu0
    %1791 = vdwg.mxu0
    %v1792 = vmax.f32 %v1786, 0.0
    %v1793 = vmax.f32 %v1789, 0.0
    %1794 = vst [vmem:[#allocation17] sm:$0xff] %v1792
    %1795 = vst [vmem:[#allocation17 + $0x8] sm:$0xff] %v1793
    // Predicated region
    $region78: #{tpu_custom_call.1} parent=1 // pred_check
      _
    $region79: #{tpu_custom_call.1} parent=1 // pred_check_branch
      %1797 = sbr.rel (0) target = $region81
    $region80: #{tpu_custom_call.1} parent=1 // pred_region
      %s1799 = ssub.s32 256, 256
      %1800 = vsyncadd [#allocation4], %s1799
      %s1801 = sshll.u32 [#allocation17], 4
      %s1802 = int_to_ptr.vmem [resolvable:$true] %s1801
      %1807 = dma.vmem_to_hbm [thread:$0]  %s1802, 256, %s10, [#allocation4], 128, 128, 8
    $region81: #{tpu_custom_call.1} parent=1 // pred_fallthru
      _
    // Predicated region
    $region82: #{tpu_custom_call.1} parent=1 // pred_check
      _
    $region83: #{tpu_custom_call.1} parent=1 // pred_check_branch
      %1809 = sbr.rel (0) target = $region85
    $region84: #{tpu_custom_call.1} parent=1 // pred_region
      %1810 = dma.done [#allocation4], 256
    $region85: #{tpu_custom_call.1} parent=1 // pred_fallthru
      _
    %1811 = vsyncpa [#allocation3], 1
    %1812 = vsyncpa [#allocation6], 1
    %1813 = vsyncpa [#allocation9], 1
    %1814 = vsyncpa [#allocation12], 1
    %1815 = vsyncpa [#allocation15], 1
    %1816 = vsyncpa [#allocation4], 1

</llo_original>
